<compile_context>
chip_gen: v7x
topology: tpu7x:2x2x1
jax: 0.10.0
libtpu: 0.0.40
codegen_flags: <defaults>
</compile_context>

<pallas_src>
import math

import jax
import jax.numpy as jnp
from jax.experimental import pallas as pl
from jax.experimental.pallas import tpu as pltpu

_HALF_LOG_2PI = 0.9189385332046727  # 0.5 * log(2*pi)


def _fused_math(loc, scale, value, eps):
    """Shared rsample + log_prob math on one VMEM tile."""
    # Numerically stable softplus: max(x, 0) + log1p(exp(-|x|)).
    sigma = jnp.maximum(scale, 0.0) + jnp.log1p(jnp.exp(-jnp.abs(scale)))
    sample = loc + sigma * eps
    inv_sigma = pl.reciprocal(sigma, approx=True)  # EUP slot; kernel is HBM-bound
    z = (value - loc) * inv_sigma
    lp = -0.5 * (z * z) - jnp.log(sigma) - _HALF_LOG_2PI
    return sample, jnp.sum(lp, axis=-1, keepdims=True)


def _mfn_rng_kernel(seed_ref, loc_ref, scale_ref, value_ref,
                    sample_ref, logprob_ref):
    # Re-seed per grid tile so the "parallel" axis (megacore sharding) stays valid.
    pltpu.prng_seed(seed_ref[0] + pl.program_id(0) * jnp.int32(1540483477))
    eps = pltpu.stateful_normal(loc_ref.shape, jnp.float32)
    sample, lp = _fused_math(loc_ref[...], scale_ref[...], value_ref[...], eps)
    sample_ref[...] = sample
    logprob_ref[...] = lp


def _mfn_eps_kernel(loc_ref, scale_ref, value_ref, eps_ref,
                    sample_ref, logprob_ref):
    sample, lp = _fused_math(loc_ref[...], scale_ref[...], value_ref[...],
                             eps_ref[...])
    sample_ref[...] = sample
    logprob_ref[...] = lp


def _pick_tile_rows(n_rows, n_cols, itemsize=4, target_block_bytes=512 * 1024):
    """Rows per block: ~512 KiB per streamed array, a multiple of 8 sublanes."""
    rows = target_block_bytes // max(1, n_cols * itemsize)
    rows = max(8, (rows // 8) * 8)
    return int(n_rows) if rows >= n_rows else int(rows)


def meanfield_normal(loc, scale, value, *, seed=0, eps=None, tile_rows=None):
    """Fused rsample + log_prob for a MeanFieldNormal guide with event=1.

    Returns (sample, log_prob): sample has loc.shape, log_prob has
    loc.shape[:-1] (the last axis is the reduced event dim).
    """
    loc = jnp.asarray(loc, jnp.float32)
    scale = jnp.asarray(scale, jnp.float32)
    value = jnp.asarray(value, jnp.float32)

    orig_shape = loc.shape
    D = orig_shape[-1]
    batch_shape = orig_shape[:-1]
    N = int(math.prod(batch_shape)) if batch_shape else 1

    loc2 = loc.reshape(N, D)
    scale2 = scale.reshape(N, D)
    value2 = value.reshape(N, D)

    tr = int(tile_rows) if tile_rows is not None else _pick_tile_rows(N, D)
    grid = (pl.cdiv(N, tr),)
    row_block = (tr, D)
    out_shapes = (
        jax.ShapeDtypeStruct((N, D), jnp.float32),
        jax.ShapeDtypeStruct((N, 1), jnp.float32),
    )
    compiler_params = pltpu.CompilerParams(
        dimension_semantics=("parallel",))  # shards the row axis across TCs on v7x

    sample = logprob = None
    if eps is None and hasattr(pltpu, "stateful_normal"):
        # In-kernel PRNG path: avoids streaming a precomputed eps array from HBM.
        idx = lambda i, seed_ref: (i, 0)
        grid_spec = pltpu.PrefetchScalarGridSpec(
            num_scalar_prefetch=1,
            grid=grid,
            in_specs=[pl.BlockSpec(row_block, idx),
                      pl.BlockSpec(row_block, idx),
                      pl.BlockSpec(row_block, idx)],
            out_specs=(pl.BlockSpec(row_block, idx),
                       pl.BlockSpec((tr, 1), idx)),
        )
        seed_arr = jnp.asarray([seed], dtype=jnp.int32)
        try:
            sample, logprob = pl.pallas_call(
                _mfn_rng_kernel,
                out_shape=out_shapes,
                grid_spec=grid_spec,
                compiler_params=compiler_params,
            )(seed_arr, loc2, scale2, value2)
        except Exception:
            sample = logprob = None  # fall back to the host-eps kernel below

    if sample is None:
        if eps is None:
            eps = jax.random.normal(jax.random.PRNGKey(seed), (N, D), jnp.float32)
        eps2 = jnp.asarray(eps, jnp.float32).reshape(N, D)
        idx = lambda i: (i, 0)
        grid_spec = pltpu.PrefetchScalarGridSpec(
            num_scalar_prefetch=0,
            grid=grid,
            in_specs=[pl.BlockSpec(row_block, idx),
                      pl.BlockSpec(row_block, idx),
                      pl.BlockSpec(row_block, idx),
                      pl.BlockSpec(row_block, idx)],
            out_specs=(pl.BlockSpec(row_block, idx),
                       pl.BlockSpec((tr, 1), idx)),
        )
        sample, logprob = pl.pallas_call(
            _mfn_eps_kernel,
            out_shape=out_shapes,
            grid_spec=grid_spec,
            compiler_params=compiler_params,
        )(loc2, scale2, value2, eps2)

    sample = sample.reshape(orig_shape)
    logprob = logprob[:, 0].reshape(batch_shape)
    return sample, logprob


if __name__ == "__main__":
    key = jax.random.PRNGKey(0)
    k_loc, k_scale, k_noise, k_eps = jax.random.split(key, 4)

    # Small demo shape for the variational-posterior parameters.
    N, D = 64, 128
    shape = (N, D)

    # Parameter init mirroring __init__: loc ~ N(0, 0.1), scale ~ N(-3, 0.1).
    loc = 0.1 * jax.random.normal(k_loc, shape, dtype=jnp.float32)
    scale = -3.0 + 0.1 * jax.random.normal(k_scale, shape, dtype=jnp.float32)

    sigma_ref = jnp.logaddexp(scale, 0.0)  # stable softplus reference
    # Score a plausible draw from the guide (realistic log_prob usage).
    value = loc + sigma_ref * jax.random.normal(k_noise, shape, dtype=jnp.float32)

    # Primary path: eps generated in-kernel by the TPU PRNG.
    sample, logprob = meanfield_normal(loc, scale, value, seed=0)
    jax.block_until_ready((sample, logprob))

    # log_prob reference (independent of the noise stream).
    lp_ref = jnp.sum(
        -0.5 * ((value - loc) / sigma_ref) ** 2
        - jnp.log(sigma_ref) - _HALF_LOG_2PI,
        axis=-1)
    assert logprob.shape == (N,)
    assert jnp.allclose(logprob, lp_ref, rtol=2e-3, atol=1e-2), (
        float(jnp.max(jnp.abs(logprob - lp_ref))))

    # rsample sanity: implied noise (sample - loc)/sigma must look ~ N(0, 1).
    eps_hat = (sample - loc) / sigma_ref
    assert bool(jnp.all(jnp.isfinite(sample)))
    assert abs(float(jnp.mean(eps_hat))) < 0.1
    assert 0.8 < float(jnp.std(eps_hat)) < 1.2

    # Cross-check the exact reparameterization with host-provided noise.
    eps = jax.random.normal(k_eps, shape, dtype=jnp.float32)
    sample2, logprob2 = meanfield_normal(loc, scale, value, eps=eps)
    jax.block_until_ready((sample2, logprob2))
    assert jnp.allclose(sample2, loc + sigma_ref * eps, rtol=1e-5, atol=1e-5)
    assert jnp.allclose(logprob2, lp_ref, rtol=2e-3, atol=1e-2)

    # TODO(synk): forward() raises NotImplementedError in the reference module;
    # rsample()/log_prob() are the implemented compute paths.
    print("KERNEL_OK")
</pallas_src>

<mosaic_0001>
module attributes {stable_mosaic.version = 11 : i64} {
  func.func @_mfn_rng_kernel(%arg0: i32, %arg1: memref<1xi32, #tpu.memory_space<smem>>, %arg2: memref<64x128xf32, #tpu.memory_space<vmem>>, %arg3: memref<64x128xf32, #tpu.memory_space<vmem>>, %arg4: memref<64x128xf32, #tpu.memory_space<vmem>>, %arg5: memref<64x128xf32, #tpu.memory_space<vmem>>, %arg6: memref<64x1xf32, #tpu.memory_space<vmem>>) attributes {dimension_semantics = [#tpu.dimension_semantics<parallel>], iteration_bounds = array<i64: 1>, scalar_prefetch = 1 : i64, scratch_operands = 0 : i64, tpu.core_type = #tpu.core_type<tc>, window_params = [{transform_indices = @transform_0, window_bounds = array<i64: 64, 128>}, {transform_indices = @transform_1, window_bounds = array<i64: 64, 128>}, {transform_indices = @transform_2, window_bounds = array<i64: 64, 128>}, {transform_indices = @transform_3, window_bounds = array<i64: 64, 128>}, {transform_indices = @transform_4, window_bounds = array<i64: 64, 1>}]} {
    %c0 = arith.constant 0 : index
    %0 = memref.load %arg1[%c0] : memref<1xi32, #tpu.memory_space<smem>>
    %c1540483477_i32 = arith.constant 1540483477 : i32
    %1 = arith.muli %arg0, %c1540483477_i32 : i32
    %2 = arith.addi %0, %1 : i32
    "tpu.prng_set_seed_32"(%2) : (i32) -> ()
    %c0_i32 = arith.constant 0 : i32
    %c0_i32_0 = arith.constant 0 : i32
    %cst = arith.constant -0.99999994 : f32
    %cst_1 = arith.constant 1.000000e+00 : f32
    %3 = vector.broadcast %cst : f32 to vector<1x1xf32>
    %4 = vector.broadcast %cst_1 : f32 to vector<1x1xf32>
    %5 = "tpu.prng_random_bits"() : () -> vector<64x128xi32>
    %c9_i32 = arith.constant 9 : i32
    %6 = vector.broadcast %c9_i32 : i32 to vector<64x128xi32>
    %7 = arith.shrui %5, %6 : vector<64x128xi32>
    %c1065353216_i32 = arith.constant 1065353216 : i32
    %8 = vector.broadcast %c1065353216_i32 : i32 to vector<64x128xi32>
    %9 = arith.ori %7, %8 : vector<64x128xi32>
    %10 = tpu.bitcast %9 : vector<64x128xi32> -> vector<64x128xf32>
    %cst_2 = arith.constant 1.000000e+00 : f32
    %11 = vector.broadcast %cst_2 : f32 to vector<64x128xf32>
    %12 = arith.subf %10, %11 : vector<64x128xf32>
    %13 = arith.subf %4, %3 : vector<1x1xf32>
    %14 = vector.broadcast %13 : vector<1x1xf32> to vector<64x128xf32>
    %15 = arith.mulf %12, %14 : vector<64x128xf32>
    %16 = vector.broadcast %3 : vector<1x1xf32> to vector<64x128xf32>
    %17 = arith.addf %15, %16 : vector<64x128xf32>
    %18 = vector.broadcast %3 : vector<1x1xf32> to vector<64x128xf32>
    %19 = arith.maximumf %18, %17 : vector<64x128xf32>
    %cst_3 = arith.constant 0.000000e+00 : f32
    %20 = vector.broadcast %cst_3 : f32 to vector<64x128xf32>
    %21 = arith.subf %20, %19 : vector<64x128xf32>
    %22 = arith.mulf %19, %21 : vector<64x128xf32>
    %23 = math.log1p %22 : vector<64x128xf32>
    %cst_4 = arith.constant 0.000000e+00 : f32
    %24 = vector.broadcast %cst_4 : f32 to vector<64x128xf32>
    %25 = arith.subf %24, %23 : vector<64x128xf32>
    %cst_5 = arith.constant 5.000000e+00 : f32
    %26 = vector.broadcast %cst_5 : f32 to vector<64x128xf32>
    %27 = arith.cmpf olt, %25, %26 : vector<64x128xf32>
    %cst_6 = arith.constant 2.500000e+00 : f32
    %28 = vector.broadcast %cst_6 : f32 to vector<64x128xf32>
    %29 = arith.subf %25, %28 : vector<64x128xf32>
    %30 = math.sqrt %25 : vector<64x128xf32>
    %cst_7 = arith.constant 3.000000e+00 : f32
    %31 = vector.broadcast %cst_7 : f32 to vector<64x128xf32>
    %32 = arith.subf %30, %31 : vector<64x128xf32>
    %33 = arith.select %27, %29, %32 : vector<64x128xi1>, vector<64x128xf32>
    %cst_8 = arith.constant 2.81022636E-8 : f32
    %cst_9 = arith.constant -2.00214257E-4 : f32
    %34 = vector.broadcast %cst_8 : f32 to vector<64x128xf32>
    %35 = vector.broadcast %cst_9 : f32 to vector<64x128xf32>
    %36 = arith.select %27, %34, %35 : vector<64x128xi1>, vector<64x128xf32>
    %cst_10 = arith.constant 3.43273939E-7 : f32
    %cst_11 = arith.constant 1.00950558E-4 : f32
    %37 = vector.broadcast %cst_10 : f32 to vector<64x128xf32>
    %38 = vector.broadcast %cst_11 : f32 to vector<64x128xf32>
    %39 = arith.select %27, %37, %38 : vector<64x128xi1>, vector<64x128xf32>
    %40 = arith.mulf %36, %33 : vector<64x128xf32>
    %41 = arith.addf %39, %40 : vector<64x128xf32>
    %cst_12 = arith.constant -3.5233877E-6 : f32
    %cst_13 = arith.constant 0.00134934322 : f32
    %42 = vector.broadcast %cst_12 : f32 to vector<64x128xf32>
    %43 = vector.broadcast %cst_13 : f32 to vector<64x128xf32>
    %44 = arith.select %27, %42, %43 : vector<64x128xi1>, vector<64x128xf32>
    %45 = arith.mulf %41, %33 : vector<64x128xf32>
    %46 = arith.addf %44, %45 : vector<64x128xf32>
    %cst_14 = arith.constant -4.39150654E-6 : f32
    %cst_15 = arith.constant -0.00367342844 : f32
    %47 = vector.broadcast %cst_14 : f32 to vector<64x128xf32>
    %48 = vector.broadcast %cst_15 : f32 to vector<64x128xf32>
    %49 = arith.select %27, %47, %48 : vector<64x128xi1>, vector<64x128xf32>
    %50 = arith.mulf %46, %33 : vector<64x128xf32>
    %51 = arith.addf %49, %50 : vector<64x128xf32>
    %cst_16 = arith.constant 2.1858087E-4 : f32
    %cst_17 = arith.constant 0.00573950773 : f32
    %52 = vector.broadcast %cst_16 : f32 to vector<64x128xf32>
    %53 = vector.broadcast %cst_17 : f32 to vector<64x128xf32>
    %54 = arith.select %27, %52, %53 : vector<64x128xi1>, vector<64x128xf32>
    %55 = arith.mulf %51, %33 : vector<64x128xf32>
    %56 = arith.addf %54, %55 : vector<64x128xf32>
    %cst_18 = arith.constant -0.00125372503 : f32
    %cst_19 = arith.constant -0.0076224613 : f32
    %57 = vector.broadcast %cst_18 : f32 to vector<64x128xf32>
    %58 = vector.broadcast %cst_19 : f32 to vector<64x128xf32>
    %59 = arith.select %27, %57, %58 : vector<64x128xi1>, vector<64x128xf32>
    %60 = arith.mulf %56, %33 : vector<64x128xf32>
    %61 = arith.addf %59, %60 : vector<64x128xf32>
    %cst_20 = arith.constant -0.00417768164 : f32
    %cst_21 = arith.constant 0.00943887047 : f32
    %62 = vector.broadcast %cst_20 : f32 to vector<64x128xf32>
    %63 = vector.broadcast %cst_21 : f32 to vector<64x128xf32>
    %64 = arith.select %27, %62, %63 : vector<64x128xi1>, vector<64x128xf32>
    %65 = arith.mulf %61, %33 : vector<64x128xf32>
    %66 = arith.addf %64, %65 : vector<64x128xf32>
    %cst_22 = arith.constant 0.246640727 : f32
    %cst_23 = arith.constant 1.00167406 : f32
    %67 = vector.broadcast %cst_22 : f32 to vector<64x128xf32>
    %68 = vector.broadcast %cst_23 : f32 to vector<64x128xf32>
    %69 = arith.select %27, %67, %68 : vector<64x128xi1>, vector<64x128xf32>
    %70 = arith.mulf %66, %33 : vector<64x128xf32>
    %71 = arith.addf %69, %70 : vector<64x128xf32>
    %cst_24 = arith.constant 1.50140941 : f32
    %cst_25 = arith.constant 2.83297682 : f32
    %72 = vector.broadcast %cst_24 : f32 to vector<64x128xf32>
    %73 = vector.broadcast %cst_25 : f32 to vector<64x128xf32>
    %74 = arith.select %27, %72, %73 : vector<64x128xi1>, vector<64x128xf32>
    %75 = arith.mulf %71, %33 : vector<64x128xf32>
    %76 = arith.addf %74, %75 : vector<64x128xf32>
    %77 = math.absf %19 : vector<64x128xf32>
    %cst_26 = arith.constant 1.000000e+00 : f32
    %78 = vector.broadcast %cst_26 : f32 to vector<64x128xf32>
    %79 = arith.cmpf oeq, %77, %78 : vector<64x128xf32>
    %cst_27 = arith.constant 0x7F800000 : f32
    %80 = vector.broadcast %cst_27 : f32 to vector<64x128xf32>
    %81 = arith.mulf %80, %19 : vector<64x128xf32>
    %82 = arith.mulf %76, %19 : vector<64x128xf32>
    %83 = arith.select %79, %81, %82 : vector<64x128xi1>, vector<64x128xf32>
    %cst_28 = arith.constant 1.41421354 : f32
    %84 = vector.broadcast %cst_28 : f32 to vector<64x128xf32>
    %85 = arith.mulf %84, %83 : vector<64x128xf32>
    %c0_29 = arith.constant 0 : index
    %c0_30 = arith.constant 0 : index
    %86 = vector.load %arg2[%c0_29, %c0_30] : memref<64x128xf32, #tpu.memory_space<vmem>>, vector<64x128xf32>
    %c0_31 = arith.constant 0 : index
    %c0_32 = arith.constant 0 : index
    %87 = vector.load %arg3[%c0_31, %c0_32] : memref<64x128xf32, #tpu.memory_space<vmem>>, vector<64x128xf32>
    %c0_33 = arith.constant 0 : index
    %c0_34 = arith.constant 0 : index
    %88 = vector.load %arg4[%c0_33, %c0_34] : memref<64x128xf32, #tpu.memory_space<vmem>>, vector<64x128xf32>
    %cst_35 = arith.constant 0.000000e+00 : f32
    %89 = vector.broadcast %cst_35 : f32 to vector<64x128xf32>
    %90 = arith.maximumf %87, %89 : vector<64x128xf32>
    %91 = math.absf %87 : vector<64x128xf32>
    %cst_36 = arith.constant 0.000000e+00 : f32
    %92 = vector.broadcast %cst_36 : f32 to vector<64x128xf32>
    %93 = arith.subf %92, %91 : vector<64x128xf32>
    %94 = math.exp %93 : vector<64x128xf32>
    %95 = math.log1p %94 : vector<64x128xf32>
    %96 = arith.addf %90, %95 : vector<64x128xf32>
    %97 = arith.mulf %96, %85 : vector<64x128xf32>
    %98 = arith.addf %86, %97 : vector<64x128xf32>
    %99 = tpu.reciprocal %96 {approx = true} : vector<64x128xf32> -> vector<64x128xf32>
    %100 = arith.subf %88, %86 : vector<64x128xf32>
    %101 = arith.mulf %100, %99 : vector<64x128xf32>
    %102 = arith.mulf %101, %101 : vector<64x128xf32>
    %cst_37 = arith.constant -5.000000e-01 : f32
    %103 = vector.broadcast %cst_37 : f32 to vector<64x128xf32>
    %104 = arith.mulf %103, %102 : vector<64x128xf32>
    %105 = math.log %96 : vector<64x128xf32>
    %106 = arith.subf %104, %105 : vector<64x128xf32>
    %cst_38 = arith.constant 0.918938517 : f32
    %107 = vector.broadcast %cst_38 : f32 to vector<64x128xf32>
    %108 = arith.subf %106, %107 : vector<64x128xf32>
    %cst_39 = arith.constant dense<0.000000e+00> : vector<64xf32>
    %109 = vector.multi_reduction <add>, %108, %cst_39 [1] : vector<64x128xf32> to vector<64xf32>
    %110 = vector.shape_cast %109 : vector<64xf32> to vector<64x1xf32>
    %c0_40 = arith.constant 0 : index
    %c0_41 = arith.constant 0 : index
    %111 = vector.load %arg5[%c0_40, %c0_41] : memref<64x128xf32, #tpu.memory_space<vmem>>, vector<64x128xf32>
    tpu.vector_store %arg5[%c0_40, %c0_41], %98 {strides = array<i32>} : memref<64x128xf32, #tpu.memory_space<vmem>>, vector<64x128xf32>,
    %c0_42 = arith.constant 0 : index
    %c0_43 = arith.constant 0 : index
    %112 = vector.load %arg6[%c0_42, %c0_43] : memref<64x1xf32, #tpu.memory_space<vmem>>, vector<64x1xf32>
    tpu.vector_store %arg6[%c0_42, %c0_43], %110 {strides = array<i32>} : memref<64x1xf32, #tpu.memory_space<vmem>>, vector<64x1xf32>,
    return
  }
  func.func @transform_0(%arg0: i32, %arg1: memref<1xi32, #tpu.memory_space<smem>>) -> (i32, i32) {
    %c0_i32 = arith.constant 0 : i32
    %c0_i32_0 = arith.constant 0 : i32
    return %arg0, %c0_i32 : i32, i32
  }
  func.func @transform_1(%arg0: i32, %arg1: memref<1xi32, #tpu.memory_space<smem>>) -> (i32, i32) {
    %c0_i32 = arith.constant 0 : i32
    %c0_i32_0 = arith.constant 0 : i32
    return %arg0, %c0_i32 : i32, i32
  }
  func.func @transform_2(%arg0: i32, %arg1: memref<1xi32, #tpu.memory_space<smem>>) -> (i32, i32) {
    %c0_i32 = arith.constant 0 : i32
    %c0_i32_0 = arith.constant 0 : i32
    return %arg0, %c0_i32 : i32, i32
  }
  func.func @transform_3(%arg0: i32, %arg1: memref<1xi32, #tpu.memory_space<smem>>) -> (i32, i32) {
    %c0_i32 = arith.constant 0 : i32
    %c0_i32_0 = arith.constant 0 : i32
    return %arg0, %c0_i32 : i32, i32
  }
  func.func @transform_4(%arg0: i32, %arg1: memref<1xi32, #tpu.memory_space<smem>>) -> (i32, i32) {
    %c0_i32 = arith.constant 0 : i32
    %c0_i32_0 = arith.constant 0 : i32
    return %arg0, %c0_i32 : i32, i32
  }
}

module attributes {stable_mosaic.version = 11 : i64} {
  func.func @_mfn_eps_kernel(%arg0: i32, %arg1: memref<64x128xf32, #tpu.memory_space<vmem>>, %arg2: memref<64x128xf32, #tpu.memory_space<vmem>>, %arg3: memref<64x128xf32, #tpu.memory_space<vmem>>, %arg4: memref<64x128xf32, #tpu.memory_space<vmem>>, %arg5: memref<64x128xf32, #tpu.memory_space<vmem>>, %arg6: memref<64x1xf32, #tpu.memory_space<vmem>>) attributes {dimension_semantics = [#tpu.dimension_semantics<parallel>], iteration_bounds = array<i64: 1>, scalar_prefetch = 0 : i64, scratch_operands = 0 : i64, tpu.core_type = #tpu.core_type<tc>, window_params = [{transform_indices = @transform_0, window_bounds = array<i64: 64, 128>}, {transform_indices = @transform_1, window_bounds = array<i64: 64, 128>}, {transform_indices = @transform_2, window_bounds = array<i64: 64, 128>}, {transform_indices = @transform_3, window_bounds = array<i64: 64, 128>}, {transform_indices = @transform_4, window_bounds = array<i64: 64, 128>}, {transform_indices = @transform_5, window_bounds = array<i64: 64, 1>}]} {
    %c0 = arith.constant 0 : index
    %c0_0 = arith.constant 0 : index
    %0 = vector.load %arg1[%c0, %c0_0] : memref<64x128xf32, #tpu.memory_space<vmem>>, vector<64x128xf32>
    %c0_1 = arith.constant 0 : index
    %c0_2 = arith.constant 0 : index
    %1 = vector.load %arg2[%c0_1, %c0_2] : memref<64x128xf32, #tpu.memory_space<vmem>>, vector<64x128xf32>
    %c0_3 = arith.constant 0 : index
    %c0_4 = arith.constant 0 : index
    %2 = vector.load %arg3[%c0_3, %c0_4] : memref<64x128xf32, #tpu.memory_space<vmem>>, vector<64x128xf32>
    %c0_5 = arith.constant 0 : index
    %c0_6 = arith.constant 0 : index
    %3 = vector.load %arg4[%c0_5, %c0_6] : memref<64x128xf32, #tpu.memory_space<vmem>>, vector<64x128xf32>
    %cst = arith.constant 0.000000e+00 : f32
    %4 = vector.broadcast %cst : f32 to vector<64x128xf32>
    %5 = arith.maximumf %1, %4 : vector<64x128xf32>
    %6 = math.absf %1 : vector<64x128xf32>
    %cst_7 = arith.constant 0.000000e+00 : f32
    %7 = vector.broadcast %cst_7 : f32 to vector<64x128xf32>
    %8 = arith.subf %7, %6 : vector<64x128xf32>
    %9 = math.exp %8 : vector<64x128xf32>
    %10 = math.log1p %9 : vector<64x128xf32>
    %11 = arith.addf %5, %10 : vector<64x128xf32>
    %12 = arith.mulf %11, %3 : vector<64x128xf32>
    %13 = arith.addf %0, %12 : vector<64x128xf32>
    %14 = tpu.reciprocal %11 {approx = true} : vector<64x128xf32> -> vector<64x128xf32>
    %15 = arith.subf %2, %0 : vector<64x128xf32>
    %16 = arith.mulf %15, %14 : vector<64x128xf32>
    %17 = arith.mulf %16, %16 : vector<64x128xf32>
    %cst_8 = arith.constant -5.000000e-01 : f32
    %18 = vector.broadcast %cst_8 : f32 to vector<64x128xf32>
    %19 = arith.mulf %18, %17 : vector<64x128xf32>
    %20 = math.log %11 : vector<64x128xf32>
    %21 = arith.subf %19, %20 : vector<64x128xf32>
    %cst_9 = arith.constant 0.918938517 : f32
    %22 = vector.broadcast %cst_9 : f32 to vector<64x128xf32>
    %23 = arith.subf %21, %22 : vector<64x128xf32>
    %cst_10 = arith.constant dense<0.000000e+00> : vector<64xf32>
    %24 = vector.multi_reduction <add>, %23, %cst_10 [1] : vector<64x128xf32> to vector<64xf32>
    %25 = vector.shape_cast %24 : vector<64xf32> to vector<64x1xf32>
    %c0_11 = arith.constant 0 : index
    %c0_12 = arith.constant 0 : index
    %26 = vector.load %arg5[%c0_11, %c0_12] : memref<64x128xf32, #tpu.memory_space<vmem>>, vector<64x128xf32>
    tpu.vector_store %arg5[%c0_11, %c0_12], %13 {strides = array<i32>} : memref<64x128xf32, #tpu.memory_space<vmem>>, vector<64x128xf32>,
    %c0_13 = arith.constant 0 : index
    %c0_14 = arith.constant 0 : index
    %27 = vector.load %arg6[%c0_13, %c0_14] : memref<64x1xf32, #tpu.memory_space<vmem>>, vector<64x1xf32>
    tpu.vector_store %arg6[%c0_13, %c0_14], %25 {strides = array<i32>} : memref<64x1xf32, #tpu.memory_space<vmem>>, vector<64x1xf32>,
    return
  }
  func.func @transform_0(%arg0: i32) -> (i32, i32) {
    %c0_i32 = arith.constant 0 : i32
    %c0_i32_0 = arith.constant 0 : i32
    return %arg0, %c0_i32 : i32, i32
  }
  func.func @transform_1(%arg0: i32) -> (i32, i32) {
    %c0_i32 = arith.constant 0 : i32
    %c0_i32_0 = arith.constant 0 : i32
    return %arg0, %c0_i32 : i32, i32
  }
  func.func @transform_2(%arg0: i32) -> (i32, i32) {
    %c0_i32 = arith.constant 0 : i32
    %c0_i32_0 = arith.constant 0 : i32
    return %arg0, %c0_i32 : i32, i32
  }
  func.func @transform_3(%arg0: i32) -> (i32, i32) {
    %c0_i32 = arith.constant 0 : i32
    %c0_i32_0 = arith.constant 0 : i32
    return %arg0, %c0_i32 : i32, i32
  }
  func.func @transform_4(%arg0: i32) -> (i32, i32) {
    %c0_i32 = arith.constant 0 : i32
    %c0_i32_0 = arith.constant 0 : i32
    return %arg0, %c0_i32 : i32, i32
  }
  func.func @transform_5(%arg0: i32) -> (i32, i32) {
    %c0_i32 = arith.constant 0 : i32
    %c0_i32_0 = arith.constant 0 : i32
    return %arg0, %c0_i32 : i32, i32
  }
}

</mosaic_0001>

<llo_original>
// kernel: tpu_custom_call.1
$region0: #{tpu_custom_call.1}
  #allocation0 [shape = 'u32[]', space=smem, size = 0x4, offset = 0x4, fixed_abs, tag = 'smem constant byte address 0x4 - core index']
  #allocation1 [shape = 'u32[144,128]{1,0:T(1,128)}', space=vmem, size = 0x12000, scoped, tag = 'internal scratch']
  #allocation2 [shape = 's32[1]{0}', space=sflag, size = 0x4, scoped, tag = 'scoped memory for tpu_custom_call.1']
  #allocation3 [shape = 's32[1]{0:T(128)S(6)}', space=smem, size = 0x200, scoped, tag = 'prefetched SMEM operand 0']
  %s0 = inlined_call_operand.<no memory space> [shape: s32[1], index: 0, kind: input, shape index: {}]
  %s1 = inlined_call_operand.hbm [shape: f32[64,128], index: 1, kind: input, shape index: {}]
  %s2 = inlined_call_operand.hbm [shape: f32[64,128], index: 2, kind: input, shape index: {}]
  %s3 = inlined_call_operand.hbm [shape: f32[64,128], index: 3, kind: input, shape index: {}]
  %s4 = inlined_call_operand.hbm [shape: f32[64,128], index: 4, kind: output, shape index: {0}]
  %s5 = inlined_call_operand.vmem [shape: f32[64,1], index: 5, kind: output, shape index: {1}]
  %6 = xla_tuple %s4, %s5
  %s7 = sld [smem:[#allocation0]]
  $region42: #{tpu_custom_call.1} parent=0
    _
  %s9 = ssub.s32 1, %s7
  %s10 = scalar_select 0, %s9, %s7
  %11 = sst [smem:[#allocation3]] %s0
  $region1: #{tpu_custom_call.1} parent=0
    #allocation4 [shape = 'u8[32768]{0}', space=vmem, size = 0x8000, scoped, tag = 'input window, operand 1, single buffered']
    #allocation5 [shape = 's32[1]{0}', space=sflag, size = 0x4, scoped, tag = 'scoped memory for tpu_custom_call.1']
    #allocation6 [shape = 's32[1]{0}', space=sflag, size = 0x4, scoped, tag = 'scoped memory for tpu_custom_call.1']
    #allocation7 [shape = 'u8[32768]{0}', space=vmem, size = 0x8000, scoped, tag = 'input window, operand 2, single buffered']
    #allocation8 [shape = 's32[1]{0}', space=sflag, size = 0x4, scoped, tag = 'scoped memory for tpu_custom_call.1']
    #allocation9 [shape = 'u8[32768]{0}', space=vmem, size = 0x8000, scoped, tag = 'input window, operand 3, single buffered']
    #allocation10 [shape = 'u8[32768]{0}', space=vmem, size = 0x8000, scoped, tag = 'output window, operand 0, single buffered']
    %12 = vsyncpa [#allocation5], 0
    %13 = vsyncpa [#allocation8], 0
    %14 = vsyncpa [#allocation6], 0
    // Predicated region
    $region2: #{tpu_custom_call.1} parent=1 // pred_check
      _
    $region3: #{tpu_custom_call.1} parent=1 // pred_check_branch
      %16 = sbr.rel (0) target = $region5
    $region4: #{tpu_custom_call.1} parent=1 // pred_region
      %s18 = ssub.s32 1024, 1024
      %19 = vsyncadd [#allocation5], %s18
      %s20 = sshll.u32 [#allocation4], 4
      %s21 = int_to_ptr.vmem [resolvable:$true] %s20
      %26 = dma.hbm_to_vmem [thread:$0]  %s1, 1024, %s21, [#allocation5], 128, 128, 8
    $region5: #{tpu_custom_call.1} parent=1 // pred_fallthru
      _
    // Predicated region
    $region6: #{tpu_custom_call.1} parent=1 // pred_check
      _
    $region7: #{tpu_custom_call.1} parent=1 // pred_check_branch
      %28 = sbr.rel (0) target = $region9
    $region8: #{tpu_custom_call.1} parent=1 // pred_region
      %s30 = ssub.s32 1024, 1024
      %31 = vsyncadd [#allocation8], %s30
      %s32 = sshll.u32 [#allocation7], 4
      %s33 = int_to_ptr.vmem [resolvable:$true] %s32
      %38 = dma.hbm_to_vmem [thread:$0]  %s2, 1024, %s33, [#allocation8], 128, 128, 8
    $region9: #{tpu_custom_call.1} parent=1 // pred_fallthru
      _
    // Predicated region
    $region10: #{tpu_custom_call.1} parent=1 // pred_check
      _
    $region11: #{tpu_custom_call.1} parent=1 // pred_check_branch
      %40 = sbr.rel (0) target = $region13
    $region12: #{tpu_custom_call.1} parent=1 // pred_region
      %s42 = ssub.s32 1024, 1024
      %43 = vsyncadd [#allocation8], %s42
      %s44 = sshll.u32 [#allocation9], 4
      %s45 = int_to_ptr.vmem [resolvable:$true] %s44
      %50 = dma.hbm_to_vmem [thread:$0]  %s3, 1024, %s45, [#allocation8], 128, 128, 8
    $region13: #{tpu_custom_call.1} parent=1 // pred_fallthru
      _
    // Predicated region
    $region14: #{tpu_custom_call.1} parent=1 // pred_check
      _
    $region15: #{tpu_custom_call.1} parent=1 // pred_check_branch
      %52 = sbr.rel (0) target = $region17
    $region16: #{tpu_custom_call.1} parent=1 // pred_region
      %53 = dma.done [#allocation5], 1024
    $region17: #{tpu_custom_call.1} parent=1 // pred_fallthru
      _
    // Predicated region
    $region18: #{tpu_custom_call.1} parent=1 // pred_check
      _
    $region19: #{tpu_custom_call.1} parent=1 // pred_check_branch
      %55 = sbr.rel (0) target = $region21
    $region20: #{tpu_custom_call.1} parent=1 // pred_region
      %56 = dma.done [#allocation8], 1024
    $region21: #{tpu_custom_call.1} parent=1 // pred_fallthru
      _
    // Predicated region
    $region22: #{tpu_custom_call.1} parent=1 // pred_check
      _
    $region23: #{tpu_custom_call.1} parent=1 // pred_check_branch
      %58 = sbr.rel (0) target = $region25
    $region24: #{tpu_custom_call.1} parent=1 // pred_region
      %59 = dma.done [#allocation8], 1024
    $region25: #{tpu_custom_call.1} parent=1 // pred_fallthru
      _
    %s60 = sld [smem:[#allocation3]]
    %s61 = smul.u32 0, 1540483477
    %s62 = sadd.s32 %s60, %s61
    %v63 = vlaneseq
    %v64 = vstv %s62
    %v65 = vxor.u32 %v64, %v64
    %v66 = vxor.u32 %v65, 466688986
    %v67 = vadd.s32 %v63, %v64
    %v68 = vadd.s32 %v67, %v67
    %v69 = vshll.u32 %v67, 13
    %v70 = vshrl.u32 %v67, 19
    %v71 = vor.u32 %v69, %v70
    %v72 = vxor.u32 %v68, %v71
    %v73 = vadd.s32 %v68, %v72
    %v74 = vshll.u32 %v72, 15
    %v75 = vshrl.u32 %v72, 17
    %v76 = vor.u32 %v74, %v75
    %v77 = vxor.u32 %v73, %v76
    %v78 = vadd.s32 %v73, %v77
    %v79 = vshll.u32 %v77, 26
    %v80 = vshrl.u32 %v77, 6
    %v81 = vor.u32 %v79, %v80
    %v82 = vxor.u32 %v78, %v81
    %v83 = vadd.s32 %v78, %v82
    %v84 = vshll.u32 %v82, 6
    %v85 = vshrl.u32 %v82, 26
    %v86 = vor.u32 %v84, %v85
    %v87 = vxor.u32 %v83, %v86
    %v88 = vadd.s32 %v83, %v64
    %v89 = vadd.s32 %v87, %v66
    %v90 = vadd.s32 %v89, 1
    %v91 = vadd.s32 %v88, %v90
    %v92 = vshll.u32 %v90, 17
    %v93 = vshrl.u32 %v90, 15
    %v94 = vor.u32 %v92, %v93
    %v95 = vxor.u32 %v91, %v94
    %v96 = vadd.s32 %v91, %v95
    %v97 = vshll.u32 %v95, 29
    %v98 = vshrl.u32 %v95, 3
    %v99 = vor.u32 %v97, %v98
    %v100 = vxor.u32 %v96, %v99
    %v101 = vadd.s32 %v96, %v100
    %v102 = vshll.u32 %v100, 16
    %v103 = vshrl.u32 %v100, 16
    %v104 = vor.u32 %v102, %v103
    %v105 = vxor.u32 %v101, %v104
    %v106 = vadd.s32 %v101, %v105
    %v107 = vshll.u32 %v105, 24
    %v108 = vshrl.u32 %v105, 8
    %v109 = vor.u32 %v107, %v108
    %v110 = vxor.u32 %v106, %v109
    %v111 = vadd.s32 %v106, %v66
    %v112 = vadd.s32 %v110, %v64
    %v113 = vadd.s32 %v112, 2
    %v114 = vadd.s32 %v111, %v113
    %v115 = vshll.u32 %v113, 13
    %v116 = vshrl.u32 %v113, 19
    %v117 = vor.u32 %v115, %v116
    %v118 = vxor.u32 %v114, %v117
    %v119 = vadd.s32 %v114, %v118
    %v120 = vshll.u32 %v118, 15
    %v121 = vshrl.u32 %v118, 17
    %v122 = vor.u32 %v120, %v121
    %v123 = vxor.u32 %v119, %v122
    %v124 = vadd.s32 %v119, %v123
    %v125 = vshll.u32 %v123, 26
    %v126 = vshrl.u32 %v123, 6
    %v127 = vor.u32 %v125, %v126
    %v128 = vxor.u32 %v124, %v127
    %v129 = vadd.s32 %v124, %v128
    %v130 = vshll.u32 %v128, 6
    %v131 = vshrl.u32 %v128, 26
    %v132 = vor.u32 %v130, %v131
    %v133 = vxor.u32 %v129, %v132
    %v134 = vadd.s32 %v129, %v64
    %v135 = vadd.s32 %v133, %v64
    %v136 = vadd.s32 %v135, 3
    %v137 = vadd.s32 %v134, %v136
    %v138 = vshll.u32 %v136, 17
    %v139 = vshrl.u32 %v136, 15
    %v140 = vor.u32 %v138, %v139
    %v141 = vxor.u32 %v137, %v140
    %v142 = vadd.s32 %v137, %v141
    %v143 = vshll.u32 %v141, 29
    %v144 = vshrl.u32 %v141, 3
    %v145 = vor.u32 %v143, %v144
    %v146 = vxor.u32 %v142, %v145
    %v147 = vadd.s32 %v142, %v146
    %v148 = vshll.u32 %v146, 16
    %v149 = vshrl.u32 %v146, 16
    %v150 = vor.u32 %v148, %v149
    %v151 = vxor.u32 %v147, %v150
    %v152 = vadd.s32 %v147, %v151
    %v153 = vshll.u32 %v151, 24
    %v154 = vshrl.u32 %v151, 8
    %v155 = vor.u32 %v153, %v154
    %v156 = vxor.u32 %v152, %v155
    %v157 = vadd.s32 %v152, %v64
    %v158 = vadd.s32 %v156, %v66
    %v159 = vadd.s32 %v158, 4
    %v160 = vadd.s32 %v157, %v159
    %v161 = vshll.u32 %v159, 13
    %v162 = vshrl.u32 %v159, 19
    %v163 = vor.u32 %v161, %v162
    %v164 = vxor.u32 %v160, %v163
    %v165 = vadd.s32 %v160, %v164
    %v166 = vshll.u32 %v164, 15
    %v167 = vshrl.u32 %v164, 17
    %v168 = vor.u32 %v166, %v167
    %v169 = vxor.u32 %v165, %v168
    %v170 = vadd.s32 %v165, %v169
    %v171 = vshll.u32 %v169, 26
    %v172 = vshrl.u32 %v169, 6
    %v173 = vor.u32 %v171, %v172
    %v174 = vxor.u32 %v170, %v173
    %v175 = vadd.s32 %v170, %v174
    %v176 = vshll.u32 %v174, 6
    %v177 = vshrl.u32 %v174, 26
    %v178 = vor.u32 %v176, %v177
    %v179 = vxor.u32 %v175, %v178
    %v180 = vadd.s32 %v175, %v66
    %v181 = vadd.s32 %v179, %v64
    %v182 = vadd.s32 %v181, 5
    %v183 = vxor.u32 %v180, %v182
    %184 = set.rngseed %v183
    %v185 = vrng
    %v186 = vrng
    %v187 = vrng
    %v188 = vrng
    %v189 = vrng
    %v190 = vrng
    %v191 = vrng
    %v192 = vrng
    %v193 = vshrl.u32 %v185, 9
    %v194 = vshrl.u32 %v186, 9
    %v195 = vshrl.u32 %v187, 9
    %v196 = vshrl.u32 %v188, 9
    %v197 = vshrl.u32 %v189, 9
    %v198 = vshrl.u32 %v190, 9
    %v199 = vshrl.u32 %v191, 9
    %v200 = vshrl.u32 %v192, 9
    %v201 = vor.u32 %v193, 1065353216
    %v202 = vor.u32 %v194, 1065353216
    %v203 = vor.u32 %v195, 1065353216
    %v204 = vor.u32 %v196, 1065353216
    %v205 = vor.u32 %v197, 1065353216
    %v206 = vor.u32 %v198, 1065353216
    %v207 = vor.u32 %v199, 1065353216
    %v208 = vor.u32 %v200, 1065353216
    %v217 = vsub.f32 %v201, 1.0
    %v218 = vsub.f32 %v202, 1.0
    %v219 = vsub.f32 %v203, 1.0
    %v220 = vsub.f32 %v204, 1.0
    %v221 = vsub.f32 %v205, 1.0
    %v222 = vsub.f32 %v206, 1.0
    %v223 = vsub.f32 %v207, 1.0
    %v224 = vsub.f32 %v208, 1.0
    %v225 = vmul.f32 %v217, 2.0
    %v226 = vmul.f32 %v218, 2.0
    %v227 = vmul.f32 %v219, 2.0
    %v228 = vmul.f32 %v220, 2.0
    %v229 = vmul.f32 %v221, 2.0
    %v230 = vmul.f32 %v222, 2.0
    %v231 = vmul.f32 %v223, 2.0
    %v232 = vmul.f32 %v224, 2.0
    %v233 = vadd.f32 %v225, -0.99999994
    %v234 = vadd.f32 %v226, -0.99999994
    %v235 = vadd.f32 %v227, -0.99999994
    %v236 = vadd.f32 %v228, -0.99999994
    %v237 = vadd.f32 %v229, -0.99999994
    %v238 = vadd.f32 %v230, -0.99999994
    %v239 = vadd.f32 %v231, -0.99999994
    %v240 = vadd.f32 %v232, -0.99999994
    %v241 = vmax.f32 %v233, -0.99999994
    %v242 = vmax.f32 %v234, -0.99999994
    %v243 = vmax.f32 %v235, -0.99999994
    %v244 = vmax.f32 %v236, -0.99999994
    %v245 = vmax.f32 %v237, -0.99999994
    %v246 = vmax.f32 %v238, -0.99999994
    %v247 = vmax.f32 %v239, -0.99999994
    %v248 = vmax.f32 %v240, -0.99999994
    %v249 = vsub.f32 0.0, %v241
    %v250 = vsub.f32 0.0, %v242
    %v251 = vsub.f32 0.0, %v243
    %v252 = vsub.f32 0.0, %v244
    %v253 = vsub.f32 0.0, %v245
    %v254 = vsub.f32 0.0, %v246
    %v255 = vsub.f32 0.0, %v247
    %v256 = vsub.f32 0.0, %v248
    %v257 = vmul.f32 %v241, %v249
    %v258 = vmul.f32 %v242, %v250
    %v259 = vmul.f32 %v243, %v251
    %v260 = vmul.f32 %v244, %v252
    %v261 = vmul.f32 %v245, %v253
    %v262 = vmul.f32 %v246, %v254
    %v263 = vmul.f32 %v247, %v255
    %v264 = vmul.f32 %v248, %v256
    %v265 = vadd.f32 %v257, 1.0
    %v266 = vlog2.pop %v265
    %v267 = vmul.f32 %v266, 0.6931472
    %v268 = vmul.f32 -0.5, %v257
    %v269 = vadd.f32 %v268, 1.0
    %v270 = vmul.f32 %v269, %v257
    %v271 = vand.u32 2147483647, %v257
    %vm272 = vcmp.lt.f32.partialorder %v271, 0.0004427343
    %v273 = vsel %vm272, %v270, %v267
    %v274 = vadd.f32 %v258, 1.0
    %v275 = vlog2.pop %v274
    %v276 = vmul.f32 %v275, 0.6931472
    %v277 = vmul.f32 -0.5, %v258
    %v278 = vadd.f32 %v277, 1.0
    %v279 = vmul.f32 %v278, %v258
    %v280 = vand.u32 2147483647, %v258
    %vm281 = vcmp.lt.f32.partialorder %v280, 0.0004427343
    %v282 = vsel %vm281, %v279, %v276
    %v283 = vadd.f32 %v259, 1.0
    %v284 = vlog2.pop %v283
    %v285 = vmul.f32 %v284, 0.6931472
    %v286 = vmul.f32 -0.5, %v259
    %v287 = vadd.f32 %v286, 1.0
    %v288 = vmul.f32 %v287, %v259
    %v289 = vand.u32 2147483647, %v259
    %vm290 = vcmp.lt.f32.partialorder %v289, 0.0004427343
    %v291 = vsel %vm290, %v288, %v285
    %v292 = vadd.f32 %v260, 1.0
    %v293 = vlog2.pop %v292
    %v294 = vmul.f32 %v293, 0.6931472
    %v295 = vmul.f32 -0.5, %v260
    %v296 = vadd.f32 %v295, 1.0
    %v297 = vmul.f32 %v296, %v260
    %v298 = vand.u32 2147483647, %v260
    %vm299 = vcmp.lt.f32.partialorder %v298, 0.0004427343
    %v300 = vsel %vm299, %v297, %v294
    %v301 = vadd.f32 %v261, 1.0
    %v302 = vlog2.pop %v301
    %v303 = vmul.f32 %v302, 0.6931472
    %v304 = vmul.f32 -0.5, %v261
    %v305 = vadd.f32 %v304, 1.0
    %v306 = vmul.f32 %v305, %v261
    %v307 = vand.u32 2147483647, %v261
    %vm308 = vcmp.lt.f32.partialorder %v307, 0.0004427343
    %v309 = vsel %vm308, %v306, %v303
    %v310 = vadd.f32 %v262, 1.0
    %v311 = vlog2.pop %v310
    %v312 = vmul.f32 %v311, 0.6931472
    %v313 = vmul.f32 -0.5, %v262
    %v314 = vadd.f32 %v313, 1.0
    %v315 = vmul.f32 %v314, %v262
    %v316 = vand.u32 2147483647, %v262
    %vm317 = vcmp.lt.f32.partialorder %v316, 0.0004427343
    %v318 = vsel %vm317, %v315, %v312
    %v319 = vadd.f32 %v263, 1.0
    %v320 = vlog2.pop %v319
    %v321 = vmul.f32 %v320, 0.6931472
    %v322 = vmul.f32 -0.5, %v263
    %v323 = vadd.f32 %v322, 1.0
    %v324 = vmul.f32 %v323, %v263
    %v325 = vand.u32 2147483647, %v263
    %vm326 = vcmp.lt.f32.partialorder %v325, 0.0004427343
    %v327 = vsel %vm326, %v324, %v321
    %v328 = vadd.f32 %v264, 1.0
    %v329 = vlog2.pop %v328
    %v330 = vmul.f32 %v329, 0.6931472
    %v331 = vmul.f32 -0.5, %v264
    %v332 = vadd.f32 %v331, 1.0
    %v333 = vmul.f32 %v332, %v264
    %v334 = vand.u32 2147483647, %v264
    %vm335 = vcmp.lt.f32.partialorder %v334, 0.0004427343
    %v336 = vsel %vm335, %v333, %v330
    %v337 = vsub.f32 0.0, %v273
    %v338 = vsub.f32 0.0, %v282
    %v339 = vsub.f32 0.0, %v291
    %v340 = vsub.f32 0.0, %v300
    %v341 = vsub.f32 0.0, %v309
    %v342 = vsub.f32 0.0, %v318
    %v343 = vsub.f32 0.0, %v327
    %v344 = vsub.f32 0.0, %v336
    %vm345 = vcmp.lt.f32.partialorder %v337, 5.0
    %vm346 = vcmp.lt.f32.partialorder %v338, 5.0
    %vm347 = vcmp.lt.f32.partialorder %v339, 5.0
    %vm348 = vcmp.lt.f32.partialorder %v340, 5.0
    %vm349 = vcmp.lt.f32.partialorder %v341, 5.0
    %vm350 = vcmp.lt.f32.partialorder %v342, 5.0
    %vm351 = vcmp.lt.f32.partialorder %v343, 5.0
    %vm352 = vcmp.lt.f32.partialorder %v344, 5.0
    %v353 = vsub.f32 %v337, 2.5
    %v354 = vsub.f32 %v338, 2.5
    %v355 = vsub.f32 %v339, 2.5
    %v356 = vsub.f32 %v340, 2.5
    %v357 = vsub.f32 %v341, 2.5
    %v358 = vsub.f32 %v342, 2.5
    %v359 = vsub.f32 %v343, 2.5
    %v360 = vsub.f32 %v344, 2.5
    %v361 = vrsqrt.pop %v337
    %v362 = vmul.f32 %v337, %v361
    %vm363 = vcmp.eq.f32.partialorder %v337, inf
    %v364 = vsel %vm363, %v337, %v362
    %vm365 = vcmp.eq.f32.partialorder %v337, 0.0
    %v366 = vand.u32 %v337, 2147483648
    %v367 = vsel %vm365, %v366, %v364
    %v368 = vrsqrt.pop %v338
    %v369 = vmul.f32 %v338, %v368
    %vm370 = vcmp.eq.f32.partialorder %v338, inf
    %v371 = vsel %vm370, %v338, %v369
    %vm372 = vcmp.eq.f32.partialorder %v338, 0.0
    %v373 = vand.u32 %v338, 2147483648
    %v374 = vsel %vm372, %v373, %v371
    %v375 = vrsqrt.pop %v339
    %v376 = vmul.f32 %v339, %v375
    %vm377 = vcmp.eq.f32.partialorder %v339, inf
    %v378 = vsel %vm377, %v339, %v376
    %vm379 = vcmp.eq.f32.partialorder %v339, 0.0
    %v380 = vand.u32 %v339, 2147483648
    %v381 = vsel %vm379, %v380, %v378
    %v382 = vrsqrt.pop %v340
    %v383 = vmul.f32 %v340, %v382
    %vm384 = vcmp.eq.f32.partialorder %v340, inf
    %v385 = vsel %vm384, %v340, %v383
    %vm386 = vcmp.eq.f32.partialorder %v340, 0.0
    %v387 = vand.u32 %v340, 2147483648
    %v388 = vsel %vm386, %v387, %v385
    %v389 = vrsqrt.pop %v341
    %v390 = vmul.f32 %v341, %v389
    %vm391 = vcmp.eq.f32.partialorder %v341, inf
    %v392 = vsel %vm391, %v341, %v390
    %vm393 = vcmp.eq.f32.partialorder %v341, 0.0
    %v394 = vand.u32 %v341, 2147483648
    %v395 = vsel %vm393, %v394, %v392
    %v396 = vrsqrt.pop %v342
    %v397 = vmul.f32 %v342, %v396
    %vm398 = vcmp.eq.f32.partialorder %v342, inf
    %v399 = vsel %vm398, %v342, %v397
    %vm400 = vcmp.eq.f32.partialorder %v342, 0.0
    %v401 = vand.u32 %v342, 2147483648
    %v402 = vsel %vm400, %v401, %v399
    %v403 = vrsqrt.pop %v343
    %v404 = vmul.f32 %v343, %v403
    %vm405 = vcmp.eq.f32.partialorder %v343, inf
    %v406 = vsel %vm405, %v343, %v404
    %vm407 = vcmp.eq.f32.partialorder %v343, 0.0
    %v408 = vand.u32 %v343, 2147483648
    %v409 = vsel %vm407, %v408, %v406
    %v410 = vrsqrt.pop %v344
    %v411 = vmul.f32 %v344, %v410
    %vm412 = vcmp.eq.f32.partialorder %v344, inf
    %v413 = vsel %vm412, %v344, %v411
    %vm414 = vcmp.eq.f32.partialorder %v344, 0.0
    %v415 = vand.u32 %v344, 2147483648
    %v416 = vsel %vm414, %v415, %v413
    %v417 = vsub.f32 %v367, 3.0
    %v418 = vsub.f32 %v374, 3.0
    %v419 = vsub.f32 %v381, 3.0
    %v420 = vsub.f32 %v388, 3.0
    %v421 = vsub.f32 %v395, 3.0
    %v422 = vsub.f32 %v402, 3.0
    %v423 = vsub.f32 %v409, 3.0
    %v424 = vsub.f32 %v416, 3.0
    %v425 = vsel %vm345, %v353, %v417
    %v426 = vsel %vm346, %v354, %v418
    %v427 = vsel %vm347, %v355, %v419
    %v428 = vsel %vm348, %v356, %v420
    %v429 = vsel %vm349, %v357, %v421
    %v430 = vsel %vm350, %v358, %v422
    %v431 = vsel %vm351, %v359, %v423
    %v432 = vsel %vm352, %v360, %v424
    %v433 = vsel %vm345, 2.8102264e-08, -0.00020021426
    %v434 = vsel %vm346, 2.8102264e-08, -0.00020021426
    %v435 = vsel %vm347, 2.8102264e-08, -0.00020021426
    %v436 = vsel %vm348, 2.8102264e-08, -0.00020021426
    %v437 = vsel %vm349, 2.8102264e-08, -0.00020021426
    %v438 = vsel %vm350, 2.8102264e-08, -0.00020021426
    %v439 = vsel %vm351, 2.8102264e-08, -0.00020021426
    %v440 = vsel %vm352, 2.8102264e-08, -0.00020021426
    %v441 = vsel %vm345, 3.4327394e-07, 0.00010095056
    %v442 = vsel %vm346, 3.4327394e-07, 0.00010095056
    %v443 = vsel %vm347, 3.4327394e-07, 0.00010095056
    %v444 = vsel %vm348, 3.4327394e-07, 0.00010095056
    %v445 = vsel %vm349, 3.4327394e-07, 0.00010095056
    %v446 = vsel %vm350, 3.4327394e-07, 0.00010095056
    %v447 = vsel %vm351, 3.4327394e-07, 0.00010095056
    %v448 = vsel %vm352, 3.4327394e-07, 0.00010095056
    %v449 = vmul.f32 %v433, %v425
    %v450 = vmul.f32 %v434, %v426
    %v451 = vmul.f32 %v435, %v427
    %v452 = vmul.f32 %v436, %v428
    %v453 = vmul.f32 %v437, %v429
    %v454 = vmul.f32 %v438, %v430
    %v455 = vmul.f32 %v439, %v431
    %v456 = vmul.f32 %v440, %v432
    %v457 = vadd.f32 %v441, %v449
    %v458 = vadd.f32 %v442, %v450
    %v459 = vadd.f32 %v443, %v451
    %v460 = vadd.f32 %v444, %v452
    %v461 = vadd.f32 %v445, %v453
    %v462 = vadd.f32 %v446, %v454
    %v463 = vadd.f32 %v447, %v455
    %v464 = vadd.f32 %v448, %v456
    %v465 = vsel %vm345, -3.5233877e-06, 0.0013493432
    %v466 = vsel %vm346, -3.5233877e-06, 0.0013493432
    %v467 = vsel %vm347, -3.5233877e-06, 0.0013493432
    %v468 = vsel %vm348, -3.5233877e-06, 0.0013493432
    %v469 = vsel %vm349, -3.5233877e-06, 0.0013493432
    %v470 = vsel %vm350, -3.5233877e-06, 0.0013493432
    %v471 = vsel %vm351, -3.5233877e-06, 0.0013493432
    %v472 = vsel %vm352, -3.5233877e-06, 0.0013493432
    %v473 = vmul.f32 %v457, %v425
    %v474 = vmul.f32 %v458, %v426
    %v475 = vmul.f32 %v459, %v427
    %v476 = vmul.f32 %v460, %v428
    %v477 = vmul.f32 %v461, %v429
    %v478 = vmul.f32 %v462, %v430
    %v479 = vmul.f32 %v463, %v431
    %v480 = vmul.f32 %v464, %v432
    %v481 = vadd.f32 %v465, %v473
    %v482 = vadd.f32 %v466, %v474
    %v483 = vadd.f32 %v467, %v475
    %v484 = vadd.f32 %v468, %v476
    %v485 = vadd.f32 %v469, %v477
    %v486 = vadd.f32 %v470, %v478
    %v487 = vadd.f32 %v471, %v479
    %v488 = vadd.f32 %v472, %v480
    %v489 = vsel %vm345, -4.3915065e-06, -0.0036734284
    %v490 = vsel %vm346, -4.3915065e-06, -0.0036734284
    %v491 = vsel %vm347, -4.3915065e-06, -0.0036734284
    %v492 = vsel %vm348, -4.3915065e-06, -0.0036734284
    %v493 = vsel %vm349, -4.3915065e-06, -0.0036734284
    %v494 = vsel %vm350, -4.3915065e-06, -0.0036734284
    %v495 = vsel %vm351, -4.3915065e-06, -0.0036734284
    %v496 = vsel %vm352, -4.3915065e-06, -0.0036734284
    %v497 = vmul.f32 %v481, %v425
    %v498 = vmul.f32 %v482, %v426
    %v499 = vmul.f32 %v483, %v427
    %v500 = vmul.f32 %v484, %v428
    %v501 = vmul.f32 %v485, %v429
    %v502 = vmul.f32 %v486, %v430
    %v503 = vmul.f32 %v487, %v431
    %v504 = vmul.f32 %v488, %v432
    %v505 = vadd.f32 %v489, %v497
    %v506 = vadd.f32 %v490, %v498
    %v507 = vadd.f32 %v491, %v499
    %v508 = vadd.f32 %v492, %v500
    %v509 = vadd.f32 %v493, %v501
    %v510 = vadd.f32 %v494, %v502
    %v511 = vadd.f32 %v495, %v503
    %v512 = vadd.f32 %v496, %v504
    %v513 = vsel %vm345, 0.00021858087, 0.0057395077
    %v514 = vsel %vm346, 0.00021858087, 0.0057395077
    %v515 = vsel %vm347, 0.00021858087, 0.0057395077
    %v516 = vsel %vm348, 0.00021858087, 0.0057395077
    %v517 = vsel %vm349, 0.00021858087, 0.0057395077
    %v518 = vsel %vm350, 0.00021858087, 0.0057395077
    %v519 = vsel %vm351, 0.00021858087, 0.0057395077
    %v520 = vsel %vm352, 0.00021858087, 0.0057395077
    %v521 = vmul.f32 %v505, %v425
    %v522 = vmul.f32 %v506, %v426
    %v523 = vmul.f32 %v507, %v427
    %v524 = vmul.f32 %v508, %v428
    %v525 = vmul.f32 %v509, %v429
    %v526 = vmul.f32 %v510, %v430
    %v527 = vmul.f32 %v511, %v431
    %v528 = vmul.f32 %v512, %v432
    %v529 = vadd.f32 %v513, %v521
    %v530 = vadd.f32 %v514, %v522
    %v531 = vadd.f32 %v515, %v523
    %v532 = vadd.f32 %v516, %v524
    %v533 = vadd.f32 %v517, %v525
    %v534 = vadd.f32 %v518, %v526
    %v535 = vadd.f32 %v519, %v527
    %v536 = vadd.f32 %v520, %v528
    %v537 = vsel %vm345, -0.001253725, -0.0076224613
    %v538 = vsel %vm346, -0.001253725, -0.0076224613
    %v539 = vsel %vm347, -0.001253725, -0.0076224613
    %v540 = vsel %vm348, -0.001253725, -0.0076224613
    %v541 = vsel %vm349, -0.001253725, -0.0076224613
    %v542 = vsel %vm350, -0.001253725, -0.0076224613
    %v543 = vsel %vm351, -0.001253725, -0.0076224613
    %v544 = vsel %vm352, -0.001253725, -0.0076224613
    %v545 = vmul.f32 %v529, %v425
    %v546 = vmul.f32 %v530, %v426
    %v547 = vmul.f32 %v531, %v427
    %v548 = vmul.f32 %v532, %v428
    %v549 = vmul.f32 %v533, %v429
    %v550 = vmul.f32 %v534, %v430
    %v551 = vmul.f32 %v535, %v431
    %v552 = vmul.f32 %v536, %v432
    %v553 = vadd.f32 %v537, %v545
    %v554 = vadd.f32 %v538, %v546
    %v555 = vadd.f32 %v539, %v547
    %v556 = vadd.f32 %v540, %v548
    %v557 = vadd.f32 %v541, %v549
    %v558 = vadd.f32 %v542, %v550
    %v559 = vadd.f32 %v543, %v551
    %v560 = vadd.f32 %v544, %v552
    %v561 = vsel %vm345, -0.0041776816, 0.0094388705
    %v562 = vsel %vm346, -0.0041776816, 0.0094388705
    %v563 = vsel %vm347, -0.0041776816, 0.0094388705
    %v564 = vsel %vm348, -0.0041776816, 0.0094388705
    %v565 = vsel %vm349, -0.0041776816, 0.0094388705
    %v566 = vsel %vm350, -0.0041776816, 0.0094388705
    %v567 = vsel %vm351, -0.0041776816, 0.0094388705
    %v568 = vsel %vm352, -0.0041776816, 0.0094388705
    %v569 = vmul.f32 %v553, %v425
    %v570 = vmul.f32 %v554, %v426
    %v571 = vmul.f32 %v555, %v427
    %v572 = vmul.f32 %v556, %v428
    %v573 = vmul.f32 %v557, %v429
    %v574 = vmul.f32 %v558, %v430
    %v575 = vmul.f32 %v559, %v431
    %v576 = vmul.f32 %v560, %v432
    %v577 = vadd.f32 %v561, %v569
    %v578 = vadd.f32 %v562, %v570
    %v579 = vadd.f32 %v563, %v571
    %v580 = vadd.f32 %v564, %v572
    %v581 = vadd.f32 %v565, %v573
    %v582 = vadd.f32 %v566, %v574
    %v583 = vadd.f32 %v567, %v575
    %v584 = vadd.f32 %v568, %v576
    %v585 = vsel %vm345, 0.24664073, 1.001674
    %v586 = vsel %vm346, 0.24664073, 1.001674
    %v587 = vsel %vm347, 0.24664073, 1.001674
    %v588 = vsel %vm348, 0.24664073, 1.001674
    %v589 = vsel %vm349, 0.24664073, 1.001674
    %v590 = vsel %vm350, 0.24664073, 1.001674
    %v591 = vsel %vm351, 0.24664073, 1.001674
    %v592 = vsel %vm352, 0.24664073, 1.001674
    %v593 = vmul.f32 %v577, %v425
    %v594 = vmul.f32 %v578, %v426
    %v595 = vmul.f32 %v579, %v427
    %v596 = vmul.f32 %v580, %v428
    %v597 = vmul.f32 %v581, %v429
    %v598 = vmul.f32 %v582, %v430
    %v599 = vmul.f32 %v583, %v431
    %v600 = vmul.f32 %v584, %v432
    %v601 = vadd.f32 %v585, %v593
    %v602 = vadd.f32 %v586, %v594
    %v603 = vadd.f32 %v587, %v595
    %v604 = vadd.f32 %v588, %v596
    %v605 = vadd.f32 %v589, %v597
    %v606 = vadd.f32 %v590, %v598
    %v607 = vadd.f32 %v591, %v599
    %v608 = vadd.f32 %v592, %v600
    %v609 = vsel %vm345, 1.5014094, 2.8329768
    %v610 = vsel %vm346, 1.5014094, 2.8329768
    %v611 = vsel %vm347, 1.5014094, 2.8329768
    %v612 = vsel %vm348, 1.5014094, 2.8329768
    %v613 = vsel %vm349, 1.5014094, 2.8329768
    %v614 = vsel %vm350, 1.5014094, 2.8329768
    %v615 = vsel %vm351, 1.5014094, 2.8329768
    %v616 = vsel %vm352, 1.5014094, 2.8329768
    %v617 = vmul.f32 %v601, %v425
    %v618 = vmul.f32 %v602, %v426
    %v619 = vmul.f32 %v603, %v427
    %v620 = vmul.f32 %v604, %v428
    %v621 = vmul.f32 %v605, %v429
    %v622 = vmul.f32 %v606, %v430
    %v623 = vmul.f32 %v607, %v431
    %v624 = vmul.f32 %v608, %v432
    %v625 = vadd.f32 %v609, %v617
    %v626 = vadd.f32 %v610, %v618
    %v627 = vadd.f32 %v611, %v619
    %v628 = vadd.f32 %v612, %v620
    %v629 = vadd.f32 %v613, %v621
    %v630 = vadd.f32 %v614, %v622
    %v631 = vadd.f32 %v615, %v623
    %v632 = vadd.f32 %v616, %v624
    %v633 = vand.u32 2147483647, %v241
    %v634 = vand.u32 2147483647, %v242
    %v635 = vand.u32 2147483647, %v243
    %v636 = vand.u32 2147483647, %v244
    %v637 = vand.u32 2147483647, %v245
    %v638 = vand.u32 2147483647, %v246
    %v639 = vand.u32 2147483647, %v247
    %v640 = vand.u32 2147483647, %v248
    %vm641 = vcmp.eq.f32.partialorder %v633, 1.0
    %vm642 = vcmp.eq.f32.partialorder %v634, 1.0
    %vm643 = vcmp.eq.f32.partialorder %v635, 1.0
    %vm644 = vcmp.eq.f32.partialorder %v636, 1.0
    %vm645 = vcmp.eq.f32.partialorder %v637, 1.0
    %vm646 = vcmp.eq.f32.partialorder %v638, 1.0
    %vm647 = vcmp.eq.f32.partialorder %v639, 1.0
    %vm648 = vcmp.eq.f32.partialorder %v640, 1.0
    %v649 = vmul.f32 %v241, inf
    %v650 = vmul.f32 %v242, inf
    %v651 = vmul.f32 %v243, inf
    %v652 = vmul.f32 %v244, inf
    %v653 = vmul.f32 %v245, inf
    %v654 = vmul.f32 %v246, inf
    %v655 = vmul.f32 %v247, inf
    %v656 = vmul.f32 %v248, inf
    %v657 = vmul.f32 %v625, %v241
    %v658 = vmul.f32 %v626, %v242
    %v659 = vmul.f32 %v627, %v243
    %v660 = vmul.f32 %v628, %v244
    %v661 = vmul.f32 %v629, %v245
    %v662 = vmul.f32 %v630, %v246
    %v663 = vmul.f32 %v631, %v247
    %v664 = vmul.f32 %v632, %v248
    %v665 = vsel %vm641, %v649, %v657
    %v666 = vsel %vm642, %v650, %v658
    %v667 = vsel %vm643, %v651, %v659
    %v668 = vsel %vm644, %v652, %v660
    %v669 = vsel %vm645, %v653, %v661
    %v670 = vsel %vm646, %v654, %v662
    %v671 = vsel %vm647, %v655, %v663
    %v672 = vsel %vm648, %v656, %v664
    %v673 = vmul.f32 %v665, 1.4142135
    %v674 = vmul.f32 %v666, 1.4142135
    %v675 = vmul.f32 %v667, 1.4142135
    %v676 = vmul.f32 %v668, 1.4142135
    %v677 = vmul.f32 %v669, 1.4142135
    %v678 = vmul.f32 %v670, 1.4142135
    %v679 = vmul.f32 %v671, 1.4142135
    %v680 = vmul.f32 %v672, 1.4142135
    %v681 = vld [vmem:[#allocation4] sm:$0xff]
    %v682 = vld [vmem:[#allocation4 + $0x8] sm:$0xff]
    %v683 = vld [vmem:[#allocation4 + $0x10] sm:$0xff]
    %v684 = vld [vmem:[#allocation4 + $0x18] sm:$0xff]
    %v685 = vld [vmem:[#allocation4 + $0x20] sm:$0xff]
    %v686 = vld [vmem:[#allocation4 + $0x28] sm:$0xff]
    %v687 = vld [vmem:[#allocation4 + $0x30] sm:$0xff]
    %v688 = vld [vmem:[#allocation4 + $0x38] sm:$0xff]
    %v689 = vld [vmem:[#allocation7] sm:$0xff]
    %v690 = vld [vmem:[#allocation7 + $0x8] sm:$0xff]
    %v691 = vld [vmem:[#allocation7 + $0x10] sm:$0xff]
    %v692 = vld [vmem:[#allocation7 + $0x18] sm:$0xff]
    %v693 = vld [vmem:[#allocation7 + $0x20] sm:$0xff]
    %v694 = vld [vmem:[#allocation7 + $0x28] sm:$0xff]
    %v695 = vld [vmem:[#allocation7 + $0x30] sm:$0xff]
    %v696 = vld [vmem:[#allocation7 + $0x38] sm:$0xff]
    %v697 = vld [vmem:[#allocation9] sm:$0xff]
    %v698 = vld [vmem:[#allocation9 + $0x8] sm:$0xff]
    %v699 = vld [vmem:[#allocation9 + $0x10] sm:$0xff]
    %v700 = vld [vmem:[#allocation9 + $0x18] sm:$0xff]
    %v701 = vld [vmem:[#allocation9 + $0x20] sm:$0xff]
    %v702 = vld [vmem:[#allocation9 + $0x28] sm:$0xff]
    %v703 = vld [vmem:[#allocation9 + $0x30] sm:$0xff]
    %v704 = vld [vmem:[#allocation9 + $0x38] sm:$0xff]
    %v705 = vmax.f32 %v689, 0.0
    %v706 = vmax.f32 %v690, 0.0
    %v707 = vmax.f32 %v691, 0.0
    %v708 = vmax.f32 %v692, 0.0
    %v709 = vmax.f32 %v693, 0.0
    %v710 = vmax.f32 %v694, 0.0
    %v711 = vmax.f32 %v695, 0.0
    %v712 = vmax.f32 %v696, 0.0
    %v713 = vand.u32 2147483647, %v689
    %v714 = vand.u32 2147483647, %v690
    %v715 = vand.u32 2147483647, %v691
    %v716 = vand.u32 2147483647, %v692
    %v717 = vand.u32 2147483647, %v693
    %v718 = vand.u32 2147483647, %v694
    %v719 = vand.u32 2147483647, %v695
    %v720 = vand.u32 2147483647, %v696
    %v721 = vsub.f32 0.0, %v713
    %v722 = vsub.f32 0.0, %v714
    %v723 = vsub.f32 0.0, %v715
    %v724 = vsub.f32 0.0, %v716
    %v725 = vsub.f32 0.0, %v717
    %v726 = vsub.f32 0.0, %v718
    %v727 = vsub.f32 0.0, %v719
    %v728 = vsub.f32 0.0, %v720
    %v729 = vmul.f32 %v721, 1.442695
    %v730 = vpow.pop %v729
    %v731 = vmul.f32 %v722, 1.442695
    %v732 = vpow.pop %v731
    %v733 = vmul.f32 %v723, 1.442695
    %v734 = vpow.pop %v733
    %v735 = vmul.f32 %v724, 1.442695
    %v736 = vpow.pop %v735
    %v737 = vmul.f32 %v725, 1.442695
    %v738 = vpow.pop %v737
    %v739 = vmul.f32 %v726, 1.442695
    %v740 = vpow.pop %v739
    %v741 = vmul.f32 %v727, 1.442695
    %v742 = vpow.pop %v741
    %v743 = vmul.f32 %v728, 1.442695
    %v744 = vpow.pop %v743
    %v745 = vadd.f32 %v730, 1.0
    %v746 = vlog2.pop %v745
    %v747 = vmul.f32 %v746, 0.6931472
    %v748 = vmul.f32 -0.5, %v730
    %v749 = vadd.f32 %v748, 1.0
    %v750 = vmul.f32 %v749, %v730
    %v751 = vand.u32 2147483647, %v730
    %vm752 = vcmp.lt.f32.partialorder %v751, 0.0004427343
    %v753 = vsel %vm752, %v750, %v747
    %v754 = vadd.f32 %v732, 1.0
    %v755 = vlog2.pop %v754
    %v756 = vmul.f32 %v755, 0.6931472
    %v757 = vmul.f32 -0.5, %v732
    %v758 = vadd.f32 %v757, 1.0
    %v759 = vmul.f32 %v758, %v732
    %v760 = vand.u32 2147483647, %v732
    %vm761 = vcmp.lt.f32.partialorder %v760, 0.0004427343
    %v762 = vsel %vm761, %v759, %v756
    %v763 = vadd.f32 %v734, 1.0
    %v764 = vlog2.pop %v763
    %v765 = vmul.f32 %v764, 0.6931472
    %v766 = vmul.f32 -0.5, %v734
    %v767 = vadd.f32 %v766, 1.0
    %v768 = vmul.f32 %v767, %v734
    %v769 = vand.u32 2147483647, %v734
    %vm770 = vcmp.lt.f32.partialorder %v769, 0.0004427343
    %v771 = vsel %vm770, %v768, %v765
    %v772 = vadd.f32 %v736, 1.0
    %v773 = vlog2.pop %v772
    %v774 = vmul.f32 %v773, 0.6931472
    %v775 = vmul.f32 -0.5, %v736
    %v776 = vadd.f32 %v775, 1.0
    %v777 = vmul.f32 %v776, %v736
    %v778 = vand.u32 2147483647, %v736
    %vm779 = vcmp.lt.f32.partialorder %v778, 0.0004427343
    %v780 = vsel %vm779, %v777, %v774
    %v781 = vadd.f32 %v738, 1.0
    %v782 = vlog2.pop %v781
    %v783 = vmul.f32 %v782, 0.6931472
    %v784 = vmul.f32 -0.5, %v738
    %v785 = vadd.f32 %v784, 1.0
    %v786 = vmul.f32 %v785, %v738
    %v787 = vand.u32 2147483647, %v738
    %vm788 = vcmp.lt.f32.partialorder %v787, 0.0004427343
    %v789 = vsel %vm788, %v786, %v783
    %v790 = vadd.f32 %v740, 1.0
    %v791 = vlog2.pop %v790
    %v792 = vmul.f32 %v791, 0.6931472
    %v793 = vmul.f32 -0.5, %v740
    %v794 = vadd.f32 %v793, 1.0
    %v795 = vmul.f32 %v794, %v740
    %v796 = vand.u32 2147483647, %v740
    %vm797 = vcmp.lt.f32.partialorder %v796, 0.0004427343
    %v798 = vsel %vm797, %v795, %v792
    %v799 = vadd.f32 %v742, 1.0
    %v800 = vlog2.pop %v799
    %v801 = vmul.f32 %v800, 0.6931472
    %v802 = vmul.f32 -0.5, %v742
    %v803 = vadd.f32 %v802, 1.0
    %v804 = vmul.f32 %v803, %v742
    %v805 = vand.u32 2147483647, %v742
    %vm806 = vcmp.lt.f32.partialorder %v805, 0.0004427343
    %v807 = vsel %vm806, %v804, %v801
    %v808 = vadd.f32 %v744, 1.0
    %v809 = vlog2.pop %v808
    %v810 = vmul.f32 %v809, 0.6931472
    %v811 = vmul.f32 -0.5, %v744
    %v812 = vadd.f32 %v811, 1.0
    %v813 = vmul.f32 %v812, %v744
    %v814 = vand.u32 2147483647, %v744
    %vm815 = vcmp.lt.f32.partialorder %v814, 0.0004427343
    %v816 = vsel %vm815, %v813, %v810
    %v817 = vadd.f32 %v705, %v753
    %v818 = vadd.f32 %v706, %v762
    %v819 = vadd.f32 %v707, %v771
    %v820 = vadd.f32 %v708, %v780
    %v821 = vadd.f32 %v709, %v789
    %v822 = vadd.f32 %v710, %v798
    %v823 = vadd.f32 %v711, %v807
    %v824 = vadd.f32 %v712, %v816
    %v825 = vmul.f32 %v817, %v673
    %v826 = vmul.f32 %v818, %v674
    %v827 = vmul.f32 %v819, %v675
    %v828 = vmul.f32 %v820, %v676
    %v829 = vmul.f32 %v821, %v677
    %v830 = vmul.f32 %v822, %v678
    %v831 = vmul.f32 %v823, %v679
    %v832 = vmul.f32 %v824, %v680
    %v833 = vadd.f32 %v681, %v825
    %v834 = vadd.f32 %v682, %v826
    %v835 = vadd.f32 %v683, %v827
    %v836 = vadd.f32 %v684, %v828
    %v837 = vadd.f32 %v685, %v829
    %v838 = vadd.f32 %v686, %v830
    %v839 = vadd.f32 %v687, %v831
    %v840 = vadd.f32 %v688, %v832
    %v841 = vrcp.pop %v817
    %v842 = vrcp.pop %v818
    %v843 = vrcp.pop %v819
    %v844 = vrcp.pop %v820
    %v845 = vrcp.pop %v821
    %v846 = vrcp.pop %v822
    %v847 = vrcp.pop %v823
    %v848 = vrcp.pop %v824
    %v849 = vsub.f32 %v697, %v681
    %v850 = vsub.f32 %v698, %v682
    %v851 = vsub.f32 %v699, %v683
    %v852 = vsub.f32 %v700, %v684
    %v853 = vsub.f32 %v701, %v685
    %v854 = vsub.f32 %v702, %v686
    %v855 = vsub.f32 %v703, %v687
    %v856 = vsub.f32 %v704, %v688
    %v857 = vmul.f32 %v849, %v841
    %v858 = vmul.f32 %v850, %v842
    %v859 = vmul.f32 %v851, %v843
    %v860 = vmul.f32 %v852, %v844
    %v861 = vmul.f32 %v853, %v845
    %v862 = vmul.f32 %v854, %v846
    %v863 = vmul.f32 %v855, %v847
    %v864 = vmul.f32 %v856, %v848
    %v865 = vmul.f32 %v857, %v857
    %v866 = vmul.f32 %v858, %v858
    %v867 = vmul.f32 %v859, %v859
    %v868 = vmul.f32 %v860, %v860
    %v869 = vmul.f32 %v861, %v861
    %v870 = vmul.f32 %v862, %v862
    %v871 = vmul.f32 %v863, %v863
    %v872 = vmul.f32 %v864, %v864
    %v873 = vmul.f32 %v865, -0.5
    %v874 = vmul.f32 %v866, -0.5
    %v875 = vmul.f32 %v867, -0.5
    %v876 = vmul.f32 %v868, -0.5
    %v877 = vmul.f32 %v869, -0.5
    %v878 = vmul.f32 %v870, -0.5
    %v879 = vmul.f32 %v871, -0.5
    %v880 = vmul.f32 %v872, -0.5
    %v881 = vlog2.pop %v817
    %v882 = vmul.f32 %v881, 0.6931472
    %v883 = vlog2.pop %v818
    %v884 = vmul.f32 %v883, 0.6931472
    %v885 = vlog2.pop %v819
    %v886 = vmul.f32 %v885, 0.6931472
    %v887 = vlog2.pop %v820
    %v888 = vmul.f32 %v887, 0.6931472
    %v889 = vlog2.pop %v821
    %v890 = vmul.f32 %v889, 0.6931472
    %v891 = vlog2.pop %v822
    %v892 = vmul.f32 %v891, 0.6931472
    %v893 = vlog2.pop %v823
    %v894 = vmul.f32 %v893, 0.6931472
    %v895 = vlog2.pop %v824
    %v896 = vmul.f32 %v895, 0.6931472
    %v897 = vsub.f32 %v873, %v882
    %v898 = vsub.f32 %v874, %v884
    %v899 = vsub.f32 %v875, %v886
    %v900 = vsub.f32 %v876, %v888
    %v901 = vsub.f32 %v877, %v890
    %v902 = vsub.f32 %v878, %v892
    %v903 = vsub.f32 %v879, %v894
    %v904 = vsub.f32 %v880, %v896
    %v905 = vsub.f32 %v897, 0.9189385
    %v906 = vsub.f32 %v898, 0.9189385
    %v907 = vsub.f32 %v899, 0.9189385
    %v908 = vsub.f32 %v900, 0.9189385
    %v909 = vsub.f32 %v901, 0.9189385
    %v910 = vsub.f32 %v902, 0.9189385
    %v911 = vsub.f32 %v903, 0.9189385
    %v912 = vsub.f32 %v904, 0.9189385
    %913 = vadd.xlane.f32.xlu0 %v905
    %v914 = vpop.xlane.xlu0 %913
    %915 = vadd.xlane.f32.xlu0 %v906
    %v916 = vpop.xlane.xlu0 %915
    %917 = vadd.xlane.f32.xlu0 %v907
    %v918 = vpop.xlane.xlu0 %917
    %919 = vadd.xlane.f32.xlu0 %v908
    %v920 = vpop.xlane.xlu0 %919
    %921 = vadd.xlane.f32.xlu0 %v909
    %v922 = vpop.xlane.xlu0 %921
    %923 = vadd.xlane.f32.xlu0 %v910
    %v924 = vpop.xlane.xlu0 %923
    %925 = vadd.xlane.f32.xlu0 %v911
    %v926 = vpop.xlane.xlu0 %925
    %927 = vadd.xlane.f32.xlu0 %v912
    %v928 = vpop.xlane.xlu0 %927
    %929 = vst [vmem:[#allocation10] sm:$0xff] %v833
    %930 = vst [vmem:[#allocation10 + $0x8] sm:$0xff] %v834
    %931 = vst [vmem:[#allocation10 + $0x10] sm:$0xff] %v835
    %932 = vst [vmem:[#allocation10 + $0x18] sm:$0xff] %v836
    %933 = vst [vmem:[#allocation10 + $0x20] sm:$0xff] %v837
    %934 = vst [vmem:[#allocation10 + $0x28] sm:$0xff] %v838
    %935 = vst [vmem:[#allocation10 + $0x30] sm:$0xff] %v839
    %936 = vst [vmem:[#allocation10 + $0x38] sm:$0xff] %v840
    %vm937 = vcmask 7168
    %938 = vst.msk [vmem:[%s5] sm:$0xff] %vm937, %v914
    %939 = vst.msk [vmem:[%s5 + $0x8] sm:$0xff] %vm937, %v916
    %940 = vst.msk [vmem:[%s5 + $0x10] sm:$0xff] %vm937, %v918
    %941 = vst.msk [vmem:[%s5 + $0x18] sm:$0xff] %vm937, %v920
    %942 = vst.msk [vmem:[%s5 + $0x20] sm:$0xff] %vm937, %v922
    %943 = vst.msk [vmem:[%s5 + $0x28] sm:$0xff] %vm937, %v924
    %944 = vst.msk [vmem:[%s5 + $0x30] sm:$0xff] %vm937, %v926
    %945 = vst.msk [vmem:[%s5 + $0x38] sm:$0xff] %vm937, %v928
    // Predicated region
    $region26: #{tpu_custom_call.1} parent=1 // pred_check
      _
    $region27: #{tpu_custom_call.1} parent=1 // pred_check_branch
      %947 = sbr.rel (0) target = $region29
    $region28: #{tpu_custom_call.1} parent=1 // pred_region
      %s949 = ssub.s32 1024, 1024
      %950 = vsyncadd [#allocation6], %s949
      %s951 = sshll.u32 [#allocation10], 4
      %s952 = int_to_ptr.vmem [resolvable:$true] %s951
      %957 = dma.vmem_to_hbm [thread:$0]  %s952, 1024, %s4, [#allocation6], 128, 128, 8
    $region29: #{tpu_custom_call.1} parent=1 // pred_fallthru
      _
    // Predicated region
    $region30: #{tpu_custom_call.1} parent=1 // pred_check
      _
    $region31: #{tpu_custom_call.1} parent=1 // pred_check_branch
      %959 = sbr.rel (0) target = $region33
    $region32: #{tpu_custom_call.1} parent=1 // pred_region
      _
    $region33: #{tpu_custom_call.1} parent=1 // pred_fallthru
      _
    // Predicated region
    $region34: #{tpu_custom_call.1} parent=1 // pred_check
      _
    $region35: #{tpu_custom_call.1} parent=1 // pred_check_branch
      %961 = sbr.rel (0) target = $region37
    $region36: #{tpu_custom_call.1} parent=1 // pred_region
      %962 = dma.done [#allocation6], 1024
    $region37: #{tpu_custom_call.1} parent=1 // pred_fallthru
      _
    // Predicated region
    $region38: #{tpu_custom_call.1} parent=1 // pred_check
      _
    $region39: #{tpu_custom_call.1} parent=1 // pred_check_branch
      %964 = sbr.rel (0) target = $region41
    $region40: #{tpu_custom_call.1} parent=1 // pred_region
      _
    $region41: #{tpu_custom_call.1} parent=1 // pred_fallthru
      _
    %965 = vsyncpa [#allocation5], 1
    %966 = vsyncpa [#allocation8], 1
    %967 = vsyncpa [#allocation6], 1

// kernel: tpu_custom_call.1
$region0: #{tpu_custom_call.1}
  #allocation0 [shape = 'u32[]', space=smem, size = 0x4, offset = 0x4, fixed_abs, tag = 'smem constant byte address 0x4 - core index']
  #allocation1 [shape = 'u32[144,128]{1,0:T(1,128)}', space=vmem, size = 0x12000, scoped, tag = 'internal scratch']
  %s0 = inlined_call_operand.hbm [shape: f32[64,128], index: 0, kind: input, shape index: {}]
  %s1 = inlined_call_operand.hbm [shape: f32[64,128], index: 1, kind: input, shape index: {}]
  %s2 = inlined_call_operand.hbm [shape: f32[64,128], index: 2, kind: input, shape index: {}]
  %s3 = inlined_call_operand.hbm [shape: f32[64,128], index: 3, kind: input, shape index: {}]
  %s4 = inlined_call_operand.hbm [shape: f32[64,128], index: 4, kind: output, shape index: {0}]
  %s5 = inlined_call_operand.vmem [shape: f32[64,1], index: 5, kind: output, shape index: {1}]
  %6 = xla_tuple %s4, %s5
  %s7 = sld [smem:[#allocation0]]
  $region50: #{tpu_custom_call.1} parent=0
    _
  %s9 = ssub.s32 1, %s7
  %s10 = scalar_select 0, %s9, %s7
  $region1: #{tpu_custom_call.1} parent=0
    #allocation2 [shape = 'u8[32768]{0}', space=vmem, size = 0x8000, scoped, tag = 'input window, operand 0, single buffered']
    #allocation3 [shape = 's32[1]{0}', space=sflag, size = 0x4, scoped, tag = 'scoped memory for tpu_custom_call.1']
    #allocation4 [shape = 's32[1]{0}', space=sflag, size = 0x4, scoped, tag = 'scoped memory for tpu_custom_call.1']
    #allocation5 [shape = 'u8[32768]{0}', space=vmem, size = 0x8000, scoped, tag = 'input window, operand 1, single buffered']
    #allocation6 [shape = 's32[1]{0}', space=sflag, size = 0x4, scoped, tag = 'scoped memory for tpu_custom_call.1']
    #allocation7 [shape = 'u8[32768]{0}', space=vmem, size = 0x8000, scoped, tag = 'input window, operand 2, single buffered']
    #allocation8 [shape = 'u8[32768]{0}', space=vmem, size = 0x8000, scoped, tag = 'input window, operand 3, single buffered']
    #allocation9 [shape = 's32[1]{0}', space=sflag, size = 0x4, scoped, tag = 'scoped memory for tpu_custom_call.1']
    #allocation10 [shape = 'u8[32768]{0}', space=vmem, size = 0x8000, scoped, tag = 'output window, operand 0, single buffered']
    %11 = vsyncpa [#allocation3], 0
    %12 = vsyncpa [#allocation6], 0
    %13 = vsyncpa [#allocation9], 0
    %14 = vsyncpa [#allocation4], 0
    // Predicated region
    $region2: #{tpu_custom_call.1} parent=1 // pred_check
      _
    $region3: #{tpu_custom_call.1} parent=1 // pred_check_branch
      %16 = sbr.rel (0) target = $region5
    $region4: #{tpu_custom_call.1} parent=1 // pred_region
      %s18 = ssub.s32 1024, 1024
      %19 = vsyncadd [#allocation3], %s18
      %s20 = sshll.u32 [#allocation2], 4
      %s21 = int_to_ptr.vmem [resolvable:$true] %s20
      %26 = dma.hbm_to_vmem [thread:$0]  %s0, 1024, %s21, [#allocation3], 128, 128, 8
    $region5: #{tpu_custom_call.1} parent=1 // pred_fallthru
      _
    // Predicated region
    $region6: #{tpu_custom_call.1} parent=1 // pred_check
      _
    $region7: #{tpu_custom_call.1} parent=1 // pred_check_branch
      %28 = sbr.rel (0) target = $region9
    $region8: #{tpu_custom_call.1} parent=1 // pred_region
      %s30 = ssub.s32 1024, 1024
      %31 = vsyncadd [#allocation6], %s30
      %s32 = sshll.u32 [#allocation5], 4
      %s33 = int_to_ptr.vmem [resolvable:$true] %s32
      %38 = dma.hbm_to_vmem [thread:$0]  %s1, 1024, %s33, [#allocation6], 128, 128, 8
    $region9: #{tpu_custom_call.1} parent=1 // pred_fallthru
      _
    // Predicated region
    $region10: #{tpu_custom_call.1} parent=1 // pred_check
      _
    $region11: #{tpu_custom_call.1} parent=1 // pred_check_branch
      %40 = sbr.rel (0) target = $region13
    $region12: #{tpu_custom_call.1} parent=1 // pred_region
      %s42 = ssub.s32 1024, 1024
      %43 = vsyncadd [#allocation6], %s42
      %s44 = sshll.u32 [#allocation7], 4
      %s45 = int_to_ptr.vmem [resolvable:$true] %s44
      %50 = dma.hbm_to_vmem [thread:$0]  %s2, 1024, %s45, [#allocation6], 128, 128, 8
    $region13: #{tpu_custom_call.1} parent=1 // pred_fallthru
      _
    // Predicated region
    $region14: #{tpu_custom_call.1} parent=1 // pred_check
      _
    $region15: #{tpu_custom_call.1} parent=1 // pred_check_branch
      %52 = sbr.rel (0) target = $region17
    $region16: #{tpu_custom_call.1} parent=1 // pred_region
      %s54 = ssub.s32 1024, 1024
      %55 = vsyncadd [#allocation9], %s54
      %s56 = sshll.u32 [#allocation8], 4
      %s57 = int_to_ptr.vmem [resolvable:$true] %s56
      %62 = dma.hbm_to_vmem [thread:$0]  %s3, 1024, %s57, [#allocation9], 128, 128, 8
    $region17: #{tpu_custom_call.1} parent=1 // pred_fallthru
      _
    // Predicated region
    $region18: #{tpu_custom_call.1} parent=1 // pred_check
      _
    $region19: #{tpu_custom_call.1} parent=1 // pred_check_branch
      %64 = sbr.rel (0) target = $region21
    $region20: #{tpu_custom_call.1} parent=1 // pred_region
      %65 = dma.done [#allocation3], 1024
    $region21: #{tpu_custom_call.1} parent=1 // pred_fallthru
      _
    // Predicated region
    $region22: #{tpu_custom_call.1} parent=1 // pred_check
      _
    $region23: #{tpu_custom_call.1} parent=1 // pred_check_branch
      %67 = sbr.rel (0) target = $region25
    $region24: #{tpu_custom_call.1} parent=1 // pred_region
      %68 = dma.done [#allocation6], 1024
    $region25: #{tpu_custom_call.1} parent=1 // pred_fallthru
      _
    // Predicated region
    $region26: #{tpu_custom_call.1} parent=1 // pred_check
      _
    $region27: #{tpu_custom_call.1} parent=1 // pred_check_branch
      %70 = sbr.rel (0) target = $region29
    $region28: #{tpu_custom_call.1} parent=1 // pred_region
      %71 = dma.done [#allocation6], 1024
    $region29: #{tpu_custom_call.1} parent=1 // pred_fallthru
      _
    // Predicated region
    $region30: #{tpu_custom_call.1} parent=1 // pred_check
      _
    $region31: #{tpu_custom_call.1} parent=1 // pred_check_branch
      %73 = sbr.rel (0) target = $region33
    $region32: #{tpu_custom_call.1} parent=1 // pred_region
      %74 = dma.done [#allocation9], 1024
    $region33: #{tpu_custom_call.1} parent=1 // pred_fallthru
      _
    %v75 = vld [vmem:[#allocation2] sm:$0xff]
    %v76 = vld [vmem:[#allocation2 + $0x8] sm:$0xff]
    %v77 = vld [vmem:[#allocation2 + $0x10] sm:$0xff]
    %v78 = vld [vmem:[#allocation2 + $0x18] sm:$0xff]
    %v79 = vld [vmem:[#allocation2 + $0x20] sm:$0xff]
    %v80 = vld [vmem:[#allocation2 + $0x28] sm:$0xff]
    %v81 = vld [vmem:[#allocation2 + $0x30] sm:$0xff]
    %v82 = vld [vmem:[#allocation2 + $0x38] sm:$0xff]
    %v83 = vld [vmem:[#allocation5] sm:$0xff]
    %v84 = vld [vmem:[#allocation5 + $0x8] sm:$0xff]
    %v85 = vld [vmem:[#allocation5 + $0x10] sm:$0xff]
    %v86 = vld [vmem:[#allocation5 + $0x18] sm:$0xff]
    %v87 = vld [vmem:[#allocation5 + $0x20] sm:$0xff]
    %v88 = vld [vmem:[#allocation5 + $0x28] sm:$0xff]
    %v89 = vld [vmem:[#allocation5 + $0x30] sm:$0xff]
    %v90 = vld [vmem:[#allocation5 + $0x38] sm:$0xff]
    %v91 = vld [vmem:[#allocation7] sm:$0xff]
    %v92 = vld [vmem:[#allocation7 + $0x8] sm:$0xff]
    %v93 = vld [vmem:[#allocation7 + $0x10] sm:$0xff]
    %v94 = vld [vmem:[#allocation7 + $0x18] sm:$0xff]
    %v95 = vld [vmem:[#allocation7 + $0x20] sm:$0xff]
    %v96 = vld [vmem:[#allocation7 + $0x28] sm:$0xff]
    %v97 = vld [vmem:[#allocation7 + $0x30] sm:$0xff]
    %v98 = vld [vmem:[#allocation7 + $0x38] sm:$0xff]
    %v99 = vld [vmem:[#allocation8] sm:$0xff]
    %v100 = vld [vmem:[#allocation8 + $0x8] sm:$0xff]
    %v101 = vld [vmem:[#allocation8 + $0x10] sm:$0xff]
    %v102 = vld [vmem:[#allocation8 + $0x18] sm:$0xff]
    %v103 = vld [vmem:[#allocation8 + $0x20] sm:$0xff]
    %v104 = vld [vmem:[#allocation8 + $0x28] sm:$0xff]
    %v105 = vld [vmem:[#allocation8 + $0x30] sm:$0xff]
    %v106 = vld [vmem:[#allocation8 + $0x38] sm:$0xff]
    %v107 = vmax.f32 %v83, 0.0
    %v108 = vmax.f32 %v84, 0.0
    %v109 = vmax.f32 %v85, 0.0
    %v110 = vmax.f32 %v86, 0.0
    %v111 = vmax.f32 %v87, 0.0
    %v112 = vmax.f32 %v88, 0.0
    %v113 = vmax.f32 %v89, 0.0
    %v114 = vmax.f32 %v90, 0.0
    %v115 = vand.u32 2147483647, %v83
    %v116 = vand.u32 2147483647, %v84
    %v117 = vand.u32 2147483647, %v85
    %v118 = vand.u32 2147483647, %v86
    %v119 = vand.u32 2147483647, %v87
    %v120 = vand.u32 2147483647, %v88
    %v121 = vand.u32 2147483647, %v89
    %v122 = vand.u32 2147483647, %v90
    %v123 = vsub.f32 0.0, %v115
    %v124 = vsub.f32 0.0, %v116
    %v125 = vsub.f32 0.0, %v117
    %v126 = vsub.f32 0.0, %v118
    %v127 = vsub.f32 0.0, %v119
    %v128 = vsub.f32 0.0, %v120
    %v129 = vsub.f32 0.0, %v121
    %v130 = vsub.f32 0.0, %v122
    %v131 = vmul.f32 %v123, 1.442695
    %v132 = vpow.pop %v131
    %v133 = vmul.f32 %v124, 1.442695
    %v134 = vpow.pop %v133
    %v135 = vmul.f32 %v125, 1.442695
    %v136 = vpow.pop %v135
    %v137 = vmul.f32 %v126, 1.442695
    %v138 = vpow.pop %v137
    %v139 = vmul.f32 %v127, 1.442695
    %v140 = vpow.pop %v139
    %v141 = vmul.f32 %v128, 1.442695
    %v142 = vpow.pop %v141
    %v143 = vmul.f32 %v129, 1.442695
    %v144 = vpow.pop %v143
    %v145 = vmul.f32 %v130, 1.442695
    %v146 = vpow.pop %v145
    %v147 = vadd.f32 %v132, 1.0
    %v148 = vlog2.pop %v147
    %v149 = vmul.f32 %v148, 0.6931472
    %v150 = vmul.f32 -0.5, %v132
    %v151 = vadd.f32 %v150, 1.0
    %v152 = vmul.f32 %v151, %v132
    %v153 = vand.u32 2147483647, %v132
    %vm154 = vcmp.lt.f32.partialorder %v153, 0.0004427343
    %v155 = vsel %vm154, %v152, %v149
    %v156 = vadd.f32 %v134, 1.0
    %v157 = vlog2.pop %v156
    %v158 = vmul.f32 %v157, 0.6931472
    %v159 = vmul.f32 -0.5, %v134
    %v160 = vadd.f32 %v159, 1.0
    %v161 = vmul.f32 %v160, %v134
    %v162 = vand.u32 2147483647, %v134
    %vm163 = vcmp.lt.f32.partialorder %v162, 0.0004427343
    %v164 = vsel %vm163, %v161, %v158
    %v165 = vadd.f32 %v136, 1.0
    %v166 = vlog2.pop %v165
    %v167 = vmul.f32 %v166, 0.6931472
    %v168 = vmul.f32 -0.5, %v136
    %v169 = vadd.f32 %v168, 1.0
    %v170 = vmul.f32 %v169, %v136
    %v171 = vand.u32 2147483647, %v136
    %vm172 = vcmp.lt.f32.partialorder %v171, 0.0004427343
    %v173 = vsel %vm172, %v170, %v167
    %v174 = vadd.f32 %v138, 1.0
    %v175 = vlog2.pop %v174
    %v176 = vmul.f32 %v175, 0.6931472
    %v177 = vmul.f32 -0.5, %v138
    %v178 = vadd.f32 %v177, 1.0
    %v179 = vmul.f32 %v178, %v138
    %v180 = vand.u32 2147483647, %v138
    %vm181 = vcmp.lt.f32.partialorder %v180, 0.0004427343
    %v182 = vsel %vm181, %v179, %v176
    %v183 = vadd.f32 %v140, 1.0
    %v184 = vlog2.pop %v183
    %v185 = vmul.f32 %v184, 0.6931472
    %v186 = vmul.f32 -0.5, %v140
    %v187 = vadd.f32 %v186, 1.0
    %v188 = vmul.f32 %v187, %v140
    %v189 = vand.u32 2147483647, %v140
    %vm190 = vcmp.lt.f32.partialorder %v189, 0.0004427343
    %v191 = vsel %vm190, %v188, %v185
    %v192 = vadd.f32 %v142, 1.0
    %v193 = vlog2.pop %v192
    %v194 = vmul.f32 %v193, 0.6931472
    %v195 = vmul.f32 -0.5, %v142
    %v196 = vadd.f32 %v195, 1.0
    %v197 = vmul.f32 %v196, %v142
    %v198 = vand.u32 2147483647, %v142
    %vm199 = vcmp.lt.f32.partialorder %v198, 0.0004427343
    %v200 = vsel %vm199, %v197, %v194
    %v201 = vadd.f32 %v144, 1.0
    %v202 = vlog2.pop %v201
    %v203 = vmul.f32 %v202, 0.6931472
    %v204 = vmul.f32 -0.5, %v144
    %v205 = vadd.f32 %v204, 1.0
    %v206 = vmul.f32 %v205, %v144
    %v207 = vand.u32 2147483647, %v144
    %vm208 = vcmp.lt.f32.partialorder %v207, 0.0004427343
    %v209 = vsel %vm208, %v206, %v203
    %v210 = vadd.f32 %v146, 1.0
    %v211 = vlog2.pop %v210
    %v212 = vmul.f32 %v211, 0.6931472
    %v213 = vmul.f32 -0.5, %v146
    %v214 = vadd.f32 %v213, 1.0
    %v215 = vmul.f32 %v214, %v146
    %v216 = vand.u32 2147483647, %v146
    %vm217 = vcmp.lt.f32.partialorder %v216, 0.0004427343
    %v218 = vsel %vm217, %v215, %v212
    %v219 = vadd.f32 %v107, %v155
    %v220 = vadd.f32 %v108, %v164
    %v221 = vadd.f32 %v109, %v173
    %v222 = vadd.f32 %v110, %v182
    %v223 = vadd.f32 %v111, %v191
    %v224 = vadd.f32 %v112, %v200
    %v225 = vadd.f32 %v113, %v209
    %v226 = vadd.f32 %v114, %v218
    %v227 = vmul.f32 %v219, %v99
    %v228 = vmul.f32 %v220, %v100
    %v229 = vmul.f32 %v221, %v101
    %v230 = vmul.f32 %v222, %v102
    %v231 = vmul.f32 %v223, %v103
    %v232 = vmul.f32 %v224, %v104
    %v233 = vmul.f32 %v225, %v105
    %v234 = vmul.f32 %v226, %v106
    %v235 = vadd.f32 %v75, %v227
    %v236 = vadd.f32 %v76, %v228
    %v237 = vadd.f32 %v77, %v229
    %v238 = vadd.f32 %v78, %v230
    %v239 = vadd.f32 %v79, %v231
    %v240 = vadd.f32 %v80, %v232
    %v241 = vadd.f32 %v81, %v233
    %v242 = vadd.f32 %v82, %v234
    %v243 = vrcp.pop %v219
    %v244 = vrcp.pop %v220
    %v245 = vrcp.pop %v221
    %v246 = vrcp.pop %v222
    %v247 = vrcp.pop %v223
    %v248 = vrcp.pop %v224
    %v249 = vrcp.pop %v225
    %v250 = vrcp.pop %v226
    %v251 = vsub.f32 %v91, %v75
    %v252 = vsub.f32 %v92, %v76
    %v253 = vsub.f32 %v93, %v77
    %v254 = vsub.f32 %v94, %v78
    %v255 = vsub.f32 %v95, %v79
    %v256 = vsub.f32 %v96, %v80
    %v257 = vsub.f32 %v97, %v81
    %v258 = vsub.f32 %v98, %v82
    %v259 = vmul.f32 %v251, %v243
    %v260 = vmul.f32 %v252, %v244
    %v261 = vmul.f32 %v253, %v245
    %v262 = vmul.f32 %v254, %v246
    %v263 = vmul.f32 %v255, %v247
    %v264 = vmul.f32 %v256, %v248
    %v265 = vmul.f32 %v257, %v249
    %v266 = vmul.f32 %v258, %v250
    %v267 = vmul.f32 %v259, %v259
    %v268 = vmul.f32 %v260, %v260
    %v269 = vmul.f32 %v261, %v261
    %v270 = vmul.f32 %v262, %v262
    %v271 = vmul.f32 %v263, %v263
    %v272 = vmul.f32 %v264, %v264
    %v273 = vmul.f32 %v265, %v265
    %v274 = vmul.f32 %v266, %v266
    %v275 = vmul.f32 %v267, -0.5
    %v276 = vmul.f32 %v268, -0.5
    %v277 = vmul.f32 %v269, -0.5
    %v278 = vmul.f32 %v270, -0.5
    %v279 = vmul.f32 %v271, -0.5
    %v280 = vmul.f32 %v272, -0.5
    %v281 = vmul.f32 %v273, -0.5
    %v282 = vmul.f32 %v274, -0.5
    %v283 = vlog2.pop %v219
    %v284 = vmul.f32 %v283, 0.6931472
    %v285 = vlog2.pop %v220
    %v286 = vmul.f32 %v285, 0.6931472
    %v287 = vlog2.pop %v221
    %v288 = vmul.f32 %v287, 0.6931472
    %v289 = vlog2.pop %v222
    %v290 = vmul.f32 %v289, 0.6931472
    %v291 = vlog2.pop %v223
    %v292 = vmul.f32 %v291, 0.6931472
    %v293 = vlog2.pop %v224
    %v294 = vmul.f32 %v293, 0.6931472
    %v295 = vlog2.pop %v225
    %v296 = vmul.f32 %v295, 0.6931472
    %v297 = vlog2.pop %v226
    %v298 = vmul.f32 %v297, 0.6931472
    %v299 = vsub.f32 %v275, %v284
    %v300 = vsub.f32 %v276, %v286
    %v301 = vsub.f32 %v277, %v288
    %v302 = vsub.f32 %v278, %v290
    %v303 = vsub.f32 %v279, %v292
    %v304 = vsub.f32 %v280, %v294
    %v305 = vsub.f32 %v281, %v296
    %v306 = vsub.f32 %v282, %v298
    %v307 = vsub.f32 %v299, 0.9189385
    %v308 = vsub.f32 %v300, 0.9189385
    %v309 = vsub.f32 %v301, 0.9189385
    %v310 = vsub.f32 %v302, 0.9189385
    %v311 = vsub.f32 %v303, 0.9189385
    %v312 = vsub.f32 %v304, 0.9189385
    %v313 = vsub.f32 %v305, 0.9189385
    %v314 = vsub.f32 %v306, 0.9189385
    %315 = vadd.xlane.f32.xlu0 %v307
    %v316 = vpop.xlane.xlu0 %315
    %317 = vadd.xlane.f32.xlu0 %v308
    %v318 = vpop.xlane.xlu0 %317
    %319 = vadd.xlane.f32.xlu0 %v309
    %v320 = vpop.xlane.xlu0 %319
    %321 = vadd.xlane.f32.xlu0 %v310
    %v322 = vpop.xlane.xlu0 %321
    %323 = vadd.xlane.f32.xlu0 %v311
    %v324 = vpop.xlane.xlu0 %323
    %325 = vadd.xlane.f32.xlu0 %v312
    %v326 = vpop.xlane.xlu0 %325
    %327 = vadd.xlane.f32.xlu0 %v313
    %v328 = vpop.xlane.xlu0 %327
    %329 = vadd.xlane.f32.xlu0 %v314
    %v330 = vpop.xlane.xlu0 %329
    %331 = vst [vmem:[#allocation10] sm:$0xff] %v235
    %332 = vst [vmem:[#allocation10 + $0x8] sm:$0xff] %v236
    %333 = vst [vmem:[#allocation10 + $0x10] sm:$0xff] %v237
    %334 = vst [vmem:[#allocation10 + $0x18] sm:$0xff] %v238
    %335 = vst [vmem:[#allocation10 + $0x20] sm:$0xff] %v239
    %336 = vst [vmem:[#allocation10 + $0x28] sm:$0xff] %v240
    %337 = vst [vmem:[#allocation10 + $0x30] sm:$0xff] %v241
    %338 = vst [vmem:[#allocation10 + $0x38] sm:$0xff] %v242
    %vm339 = vcmask 7168
    %340 = vst.msk [vmem:[%s5] sm:$0xff] %vm339, %v316
    %341 = vst.msk [vmem:[%s5 + $0x8] sm:$0xff] %vm339, %v318
    %342 = vst.msk [vmem:[%s5 + $0x10] sm:$0xff] %vm339, %v320
    %343 = vst.msk [vmem:[%s5 + $0x18] sm:$0xff] %vm339, %v322
    %344 = vst.msk [vmem:[%s5 + $0x20] sm:$0xff] %vm339, %v324
    %345 = vst.msk [vmem:[%s5 + $0x28] sm:$0xff] %vm339, %v326
    %346 = vst.msk [vmem:[%s5 + $0x30] sm:$0xff] %vm339, %v328
    %347 = vst.msk [vmem:[%s5 + $0x38] sm:$0xff] %vm339, %v330
    // Predicated region
    $region34: #{tpu_custom_call.1} parent=1 // pred_check
      _
    $region35: #{tpu_custom_call.1} parent=1 // pred_check_branch
      %349 = sbr.rel (0) target = $region37
    $region36: #{tpu_custom_call.1} parent=1 // pred_region
      %s351 = ssub.s32 1024, 1024
      %352 = vsyncadd [#allocation4], %s351
      %s353 = sshll.u32 [#allocation10], 4
      %s354 = int_to_ptr.vmem [resolvable:$true] %s353
      %359 = dma.vmem_to_hbm [thread:$0]  %s354, 1024, %s4, [#allocation4], 128, 128, 8
    $region37: #{tpu_custom_call.1} parent=1 // pred_fallthru
      _
    // Predicated region
    $region38: #{tpu_custom_call.1} parent=1 // pred_check
      _
    $region39: #{tpu_custom_call.1} parent=1 // pred_check_branch
      %361 = sbr.rel (0) target = $region41
    $region40: #{tpu_custom_call.1} parent=1 // pred_region
      _
    $region41: #{tpu_custom_call.1} parent=1 // pred_fallthru
      _
    // Predicated region
    $region42: #{tpu_custom_call.1} parent=1 // pred_check
      _
    $region43: #{tpu_custom_call.1} parent=1 // pred_check_branch
      %363 = sbr.rel (0) target = $region45
    $region44: #{tpu_custom_call.1} parent=1 // pred_region
      %364 = dma.done [#allocation4], 1024
    $region45: #{tpu_custom_call.1} parent=1 // pred_fallthru
      _
    // Predicated region
    $region46: #{tpu_custom_call.1} parent=1 // pred_check
      _
    $region47: #{tpu_custom_call.1} parent=1 // pred_check_branch
      %366 = sbr.rel (0) target = $region49
    $region48: #{tpu_custom_call.1} parent=1 // pred_region
      _
    $region49: #{tpu_custom_call.1} parent=1 // pred_fallthru
      _
    %367 = vsyncpa [#allocation3], 1
    %368 = vsyncpa [#allocation6], 1
    %369 = vsyncpa [#allocation9], 1
    %370 = vsyncpa [#allocation4], 1

</llo_original>
